<compile_context>
chip_gen: v7x
topology: tpu7x:2x2x1
jax: 0.10.0
libtpu: 0.0.40
codegen_flags: <defaults>
</compile_context>

<pallas_src>
import functools

import jax
import jax.numpy as jnp
from jax import lax
from jax.experimental import pallas as pl
from jax.experimental.pallas import tpu as pltpu

_LANE = 128


def _caf_kernel(x1_ref, x2_ref, x3_ref, w1_ref, b1_ref, w2_ref, b2_ref, o_ref,
                *, approx_sigmoid=False):
    # x*_ref / o_ref: (1, C, S, 128) VMEM blocks (S sublane-rows of 128 pixels).
    # w1_ref: (C, 3C), b1_ref: (C,), w2_ref: (3C, C), b2_ref: (3C,) in SMEM.
    C = x1_ref.shape[1]
    S = x1_ref.shape[2]
    f32 = jnp.float32

    # Scalar weights / biases (SMEM reads), hoisted out of the pixel-chunk loop.
    w1 = [[w1_ref[co, k] for k in range(3 * C)] for co in range(C)]
    b1 = [b1_ref[co] for co in range(C)]
    w2 = [[w2_ref[co, ci] for ci in range(C)] for co in range(3 * C)]
    b2 = [b2_ref[co] for co in range(3 * C)]

    # Walk the block in (chunk, 128) slabs: one f32 vreg per channel per chunk,
    # so the live set stays ~30 vregs (no spill traffic).
    chunk = S if S < 8 else 8
    assert S % chunk == 0, "tile sublane-rows must be <= 8 or a multiple of 8"
    n_chunks = S // chunk

    def sigmoid(v):
        if approx_sigmoid:
            # EUP exp + EUP approximate reciprocal (keeps the divide off the VALU).
            return pl.reciprocal(1.0 + jnp.exp(-v), approx=True)
        return jax.nn.sigmoid(v)

    def body(i, carry):
        r0 = pl.multiple_of(i * chunk, chunk)
        rows = pl.ds(r0, chunk)

        # Per-channel (chunk, 128) loads for the 3 inputs: 3C full vregs.
        xs = [[xr[0, c, rows, :].astype(f32) for c in range(C)]
              for xr in (x1_ref, x2_ref, x3_ref)]

        # conv1 (1x1, 3C -> C): scalar-weight VPU mul-adds; bias added last.
        mid = []
        for co in range(C):
            acc = w1[co][0] * xs[0][0]
            for k in range(1, 3 * C):
                acc = acc + w1[co][k] * xs[k // C][k % C]
            mid.append(acc + b1[co])

        # conv2 (1x1, C -> 3C) + sigmoid.
        att = []
        for co in range(3 * C):
            acc = w2[co][0] * mid[0]
            for ci in range(1, C):
                acc = acc + w2[co][ci] * mid[ci]
            att.append(sigmoid(acc + b2[co]))

        # Gated fusion with direct per-channel full-vreg stores (no concatenate).
        for c in range(C):
            fused = (att[c] * xs[0][c]
                     + att[C + c] * xs[1][c]
                     + att[2 * C + c] * xs[2][c])
            o_ref[0, c, rows, :] = fused.astype(o_ref.dtype)
        return carry

    lax.fori_loop(0, n_chunks, body, 0, unroll=True)


def channel_attention_fusion(x1, x2, x3, conv1_w, conv1_b, conv2_w, conv2_b,
                             *, tile_rows=None, approx_sigmoid=False):
    """x1/x2/x3: (N, C, H, W); conv1_w: (C, 3C, 1, 1); conv2_w: (3C, C, 1, 1).

    approx_sigmoid=True uses an EUP-only sigmoid (exp + approx reciprocal) --
    recommended on v7x where the kernel is VPU-bound; default is exact.
    """
    N, C, H, W = x1.shape
    assert x2.shape == x1.shape and x3.shape == x1.shape
    assert conv1_w.shape == (C, 3 * C, 1, 1) and conv1_b.shape == (C,)
    assert conv2_w.shape == (3 * C, C, 1, 1) and conv2_b.shape == (3 * C,)
    HW = H * W

    # Pack pixels as (R, 128): R sublane-rows of 128 lanes (pad HW only if needed).
    R = pl.cdiv(HW, _LANE)
    HW_pad = R * _LANE

    def to_rows(x):
        xv = x.reshape(N, C, HW)
        if HW_pad != HW:
            xv = jnp.pad(xv, ((0, 0), (0, 0), (0, HW_pad - HW)))
        return xv.reshape(N, C, R, _LANE)

    x1v, x2v, x3v = to_rows(x1), to_rows(x2), to_rows(x3)
    w1m = conv1_w.reshape(C, 3 * C).astype(jnp.float32)
    w2m = conv2_w.reshape(3 * C, C).astype(jnp.float32)
    b1v = conv1_b.astype(jnp.float32)
    b2v = conv2_b.astype(jnp.float32)

    # Pixel tile (in sublane-rows): default 64 rows = 8192 px = 128 KiB/input
    # block at C=4 (well inside the HBM-roofline sweet spot, ~1 MiB total VMEM
    # with double buffering).  Keep >= 2 grid steps so both v7x TensorCores
    # get work even when N == 1.
    if tile_rows is None:
        if R <= 8:
            tile_rows = R
        else:
            tile_rows = min(64, (R // 8) * 8)
            while N * pl.cdiv(R, tile_rows) < 2 and tile_rows > 8:
                tile_rows = max(8, ((tile_rows // 2) // 8) * 8)
    assert (tile_rows % 8 == 0) or (tile_rows == R and R <= 8), \
        "tile_rows must be a multiple of 8 (or the full, <=8, row extent)"

    blk = pl.BlockSpec((1, C, tile_rows, _LANE), lambda n, t: (n, 0, t, 0))
    smem = pl.BlockSpec(memory_space=pltpu.MemorySpace.SMEM)
    kernel = functools.partial(_caf_kernel, approx_sigmoid=approx_sigmoid)

    out = pl.pallas_call(
        kernel,
        out_shape=jax.ShapeDtypeStruct((N, C, R, _LANE), x1.dtype),
        grid_spec=pltpu.PrefetchScalarGridSpec(
            num_scalar_prefetch=0,
            grid=(N, pl.cdiv(R, tile_rows)),
            in_specs=[blk, blk, blk, smem, smem, smem, smem],
            out_specs=blk,
        ),
        compiler_params=pltpu.CompilerParams(
            dimension_semantics=("parallel", "parallel"),
            vmem_limit_bytes=32 * 1024 * 1024,   # safe on v5e/v6e and v7x (64 MiB phys)
        ),
    )(x1v, x2v, x3v, w1m, b1v, w2m, b2v)

    out = out.reshape(N, C, HW_pad)
    if HW_pad != HW:
        out = out[:, :, :HW]
    return out.reshape(N, C, H, W)


def _reference(x1, x2, x3, conv1_w, conv1_b, conv2_w, conv2_b):
    # Pure-JAX reference of the PyTorch forward.
    C = x1.shape[1]
    x = jnp.concatenate([x1, x2, x3], axis=1)                        # (N, 3C, H, W)
    mid = jnp.einsum("nchw,oc->nohw", x, conv1_w.reshape(C, 3 * C))
    mid = mid + conv1_b[None, :, None, None]
    att = jnp.einsum("nchw,oc->nohw", mid, conv2_w.reshape(3 * C, C))
    att = jax.nn.sigmoid(att + conv2_b[None, :, None, None])
    a1, a2, a3 = jnp.split(att, 3, axis=1)
    return a1 * x1 + a2 * x2 + a3 * x3


if __name__ == "__main__":
    key = jax.random.PRNGKey(0)
    k1, k2, k3, kw1, kb1, kw2, kb2 = jax.random.split(key, 7)

    N, C, H, W = 2, 4, 16, 16
    x1 = jax.random.normal(k1, (N, C, H, W), dtype=jnp.float32)
    x2 = jax.random.normal(k2, (N, C, H, W), dtype=jnp.float32)
    x3 = jax.random.normal(k3, (N, C, H, W), dtype=jnp.float32)

    # Deterministic synthetic Conv2d params (PyTorch default uniform init,
    # bound = 1/sqrt(fan_in), kernel_size=1).
    b1_bound = 1.0 / ((3 * C) ** 0.5)   # conv1 fan_in = 3C
    b2_bound = 1.0 / (C ** 0.5)         # conv2 fan_in = C
    conv1_w = jax.random.uniform(kw1, (C, 3 * C, 1, 1), jnp.float32, -b1_bound, b1_bound)
    conv1_b = jax.random.uniform(kb1, (C,), jnp.float32, -b1_bound, b1_bound)
    conv2_w = jax.random.uniform(kw2, (3 * C, C, 1, 1), jnp.float32, -b2_bound, b2_bound)
    conv2_b = jax.random.uniform(kb2, (12,), jnp.float32, -b2_bound, b2_bound)

    ref = _reference(x1, x2, x3, conv1_w, conv1_b, conv2_w, conv2_b)

    # Exact-sigmoid path: tight correctness check of the kernel math.
    out = channel_attention_fusion(x1, x2, x3, conv1_w, conv1_b, conv2_w, conv2_b)
    out = jax.block_until_ready(out)
    assert out.shape == (N, C, H, W)
    assert jnp.allclose(out, ref, atol=1e-5, rtol=1e-5), "mismatch vs reference"

    # v7x perf path (EUP exp + approximate reciprocal in the sigmoid); loose
    # tolerance only accounts for the hardware's approximate reciprocal.
    out_a = channel_attention_fusion(x1, x2, x3, conv1_w, conv1_b, conv2_w, conv2_b,
                                     approx_sigmoid=True)
    out_a = jax.block_until_ready(out_a)
    assert jnp.all(jnp.isfinite(out_a))
    assert jnp.allclose(out_a, ref, atol=5e-2, rtol=0), "approx-sigmoid path mismatch"

    print("KERNEL_OK")
</pallas_src>

<mosaic_0001>
module attributes {stable_mosaic.version = 11 : i64} {
  func.func @_caf_kernel(%arg0: i32, %arg1: i32, %arg2: memref<1x4x2x128xf32, #tpu.memory_space<vmem>>, %arg3: memref<1x4x2x128xf32, #tpu.memory_space<vmem>>, %arg4: memref<1x4x2x128xf32, #tpu.memory_space<vmem>>, %arg5: memref<4x12xf32, #tpu.memory_space<smem>>, %arg6: memref<4xf32, #tpu.memory_space<smem>>, %arg7: memref<12x4xf32, #tpu.memory_space<smem>>, %arg8: memref<12xf32, #tpu.memory_space<smem>>, %arg9: memref<1x4x2x128xf32, #tpu.memory_space<vmem>>) attributes {dimension_semantics = [#tpu.dimension_semantics<parallel>, #tpu.dimension_semantics<parallel>], iteration_bounds = array<i64: 2, 1>, scalar_prefetch = 0 : i64, scratch_operands = 0 : i64, tpu.core_type = #tpu.core_type<tc>, window_params = [{transform_indices = @transform_0, window_bounds = array<i64: 1, 4, 2, 128>}, {transform_indices = @transform_1, window_bounds = array<i64: 1, 4, 2, 128>}, {transform_indices = @transform_2, window_bounds = array<i64: 1, 4, 2, 128>}, {transform_indices = @transform_3, window_bounds = array<i64: 4, 12>}, {transform_indices = @transform_4, window_bounds = array<i64: 4>}, {transform_indices = @transform_5, window_bounds = array<i64: 12, 4>}, {transform_indices = @transform_6, window_bounds = array<i64: 12>}, {transform_indices = @transform_7, window_bounds = array<i64: 1, 4, 2, 128>}]} {
    %c0 = arith.constant 0 : index
    %c0_0 = arith.constant 0 : index
    %0 = memref.load %arg5[%c0, %c0_0] : memref<4x12xf32, #tpu.memory_space<smem>>
    %c0_1 = arith.constant 0 : index
    %c1 = arith.constant 1 : index
    %1 = memref.load %arg5[%c0_1, %c1] : memref<4x12xf32, #tpu.memory_space<smem>>
    %c0_2 = arith.constant 0 : index
    %c2 = arith.constant 2 : index
    %2 = memref.load %arg5[%c0_2, %c2] : memref<4x12xf32, #tpu.memory_space<smem>>
    %c0_3 = arith.constant 0 : index
    %c3 = arith.constant 3 : index
    %3 = memref.load %arg5[%c0_3, %c3] : memref<4x12xf32, #tpu.memory_space<smem>>
    %c0_4 = arith.constant 0 : index
    %c4 = arith.constant 4 : index
    %4 = memref.load %arg5[%c0_4, %c4] : memref<4x12xf32, #tpu.memory_space<smem>>
    %c0_5 = arith.constant 0 : index
    %c5 = arith.constant 5 : index
    %5 = memref.load %arg5[%c0_5, %c5] : memref<4x12xf32, #tpu.memory_space<smem>>
    %c0_6 = arith.constant 0 : index
    %c6 = arith.constant 6 : index
    %6 = memref.load %arg5[%c0_6, %c6] : memref<4x12xf32, #tpu.memory_space<smem>>
    %c0_7 = arith.constant 0 : index
    %c7 = arith.constant 7 : index
    %7 = memref.load %arg5[%c0_7, %c7] : memref<4x12xf32, #tpu.memory_space<smem>>
    %c0_8 = arith.constant 0 : index
    %c8 = arith.constant 8 : index
    %8 = memref.load %arg5[%c0_8, %c8] : memref<4x12xf32, #tpu.memory_space<smem>>
    %c0_9 = arith.constant 0 : index
    %c9 = arith.constant 9 : index
    %9 = memref.load %arg5[%c0_9, %c9] : memref<4x12xf32, #tpu.memory_space<smem>>
    %c0_10 = arith.constant 0 : index
    %c10 = arith.constant 10 : index
    %10 = memref.load %arg5[%c0_10, %c10] : memref<4x12xf32, #tpu.memory_space<smem>>
    %c0_11 = arith.constant 0 : index
    %c11 = arith.constant 11 : index
    %11 = memref.load %arg5[%c0_11, %c11] : memref<4x12xf32, #tpu.memory_space<smem>>
    %c1_12 = arith.constant 1 : index
    %c0_13 = arith.constant 0 : index
    %12 = memref.load %arg5[%c1_12, %c0_13] : memref<4x12xf32, #tpu.memory_space<smem>>
    %c1_14 = arith.constant 1 : index
    %c1_15 = arith.constant 1 : index
    %13 = memref.load %arg5[%c1_14, %c1_15] : memref<4x12xf32, #tpu.memory_space<smem>>
    %c1_16 = arith.constant 1 : index
    %c2_17 = arith.constant 2 : index
    %14 = memref.load %arg5[%c1_16, %c2_17] : memref<4x12xf32, #tpu.memory_space<smem>>
    %c1_18 = arith.constant 1 : index
    %c3_19 = arith.constant 3 : index
    %15 = memref.load %arg5[%c1_18, %c3_19] : memref<4x12xf32, #tpu.memory_space<smem>>
    %c1_20 = arith.constant 1 : index
    %c4_21 = arith.constant 4 : index
    %16 = memref.load %arg5[%c1_20, %c4_21] : memref<4x12xf32, #tpu.memory_space<smem>>
    %c1_22 = arith.constant 1 : index
    %c5_23 = arith.constant 5 : index
    %17 = memref.load %arg5[%c1_22, %c5_23] : memref<4x12xf32, #tpu.memory_space<smem>>
    %c1_24 = arith.constant 1 : index
    %c6_25 = arith.constant 6 : index
    %18 = memref.load %arg5[%c1_24, %c6_25] : memref<4x12xf32, #tpu.memory_space<smem>>
    %c1_26 = arith.constant 1 : index
    %c7_27 = arith.constant 7 : index
    %19 = memref.load %arg5[%c1_26, %c7_27] : memref<4x12xf32, #tpu.memory_space<smem>>
    %c1_28 = arith.constant 1 : index
    %c8_29 = arith.constant 8 : index
    %20 = memref.load %arg5[%c1_28, %c8_29] : memref<4x12xf32, #tpu.memory_space<smem>>
    %c1_30 = arith.constant 1 : index
    %c9_31 = arith.constant 9 : index
    %21 = memref.load %arg5[%c1_30, %c9_31] : memref<4x12xf32, #tpu.memory_space<smem>>
    %c1_32 = arith.constant 1 : index
    %c10_33 = arith.constant 10 : index
    %22 = memref.load %arg5[%c1_32, %c10_33] : memref<4x12xf32, #tpu.memory_space<smem>>
    %c1_34 = arith.constant 1 : index
    %c11_35 = arith.constant 11 : index
    %23 = memref.load %arg5[%c1_34, %c11_35] : memref<4x12xf32, #tpu.memory_space<smem>>
    %c2_36 = arith.constant 2 : index
    %c0_37 = arith.constant 0 : index
    %24 = memref.load %arg5[%c2_36, %c0_37] : memref<4x12xf32, #tpu.memory_space<smem>>
    %c2_38 = arith.constant 2 : index
    %c1_39 = arith.constant 1 : index
    %25 = memref.load %arg5[%c2_38, %c1_39] : memref<4x12xf32, #tpu.memory_space<smem>>
    %c2_40 = arith.constant 2 : index
    %c2_41 = arith.constant 2 : index
    %26 = memref.load %arg5[%c2_40, %c2_41] : memref<4x12xf32, #tpu.memory_space<smem>>
    %c2_42 = arith.constant 2 : index
    %c3_43 = arith.constant 3 : index
    %27 = memref.load %arg5[%c2_42, %c3_43] : memref<4x12xf32, #tpu.memory_space<smem>>
    %c2_44 = arith.constant 2 : index
    %c4_45 = arith.constant 4 : index
    %28 = memref.load %arg5[%c2_44, %c4_45] : memref<4x12xf32, #tpu.memory_space<smem>>
    %c2_46 = arith.constant 2 : index
    %c5_47 = arith.constant 5 : index
    %29 = memref.load %arg5[%c2_46, %c5_47] : memref<4x12xf32, #tpu.memory_space<smem>>
    %c2_48 = arith.constant 2 : index
    %c6_49 = arith.constant 6 : index
    %30 = memref.load %arg5[%c2_48, %c6_49] : memref<4x12xf32, #tpu.memory_space<smem>>
    %c2_50 = arith.constant 2 : index
    %c7_51 = arith.constant 7 : index
    %31 = memref.load %arg5[%c2_50, %c7_51] : memref<4x12xf32, #tpu.memory_space<smem>>
    %c2_52 = arith.constant 2 : index
    %c8_53 = arith.constant 8 : index
    %32 = memref.load %arg5[%c2_52, %c8_53] : memref<4x12xf32, #tpu.memory_space<smem>>
    %c2_54 = arith.constant 2 : index
    %c9_55 = arith.constant 9 : index
    %33 = memref.load %arg5[%c2_54, %c9_55] : memref<4x12xf32, #tpu.memory_space<smem>>
    %c2_56 = arith.constant 2 : index
    %c10_57 = arith.constant 10 : index
    %34 = memref.load %arg5[%c2_56, %c10_57] : memref<4x12xf32, #tpu.memory_space<smem>>
    %c2_58 = arith.constant 2 : index
    %c11_59 = arith.constant 11 : index
    %35 = memref.load %arg5[%c2_58, %c11_59] : memref<4x12xf32, #tpu.memory_space<smem>>
    %c3_60 = arith.constant 3 : index
    %c0_61 = arith.constant 0 : index
    %36 = memref.load %arg5[%c3_60, %c0_61] : memref<4x12xf32, #tpu.memory_space<smem>>
    %c3_62 = arith.constant 3 : index
    %c1_63 = arith.constant 1 : index
    %37 = memref.load %arg5[%c3_62, %c1_63] : memref<4x12xf32, #tpu.memory_space<smem>>
    %c3_64 = arith.constant 3 : index
    %c2_65 = arith.constant 2 : index
    %38 = memref.load %arg5[%c3_64, %c2_65] : memref<4x12xf32, #tpu.memory_space<smem>>
    %c3_66 = arith.constant 3 : index
    %c3_67 = arith.constant 3 : index
    %39 = memref.load %arg5[%c3_66, %c3_67] : memref<4x12xf32, #tpu.memory_space<smem>>
    %c3_68 = arith.constant 3 : index
    %c4_69 = arith.constant 4 : index
    %40 = memref.load %arg5[%c3_68, %c4_69] : memref<4x12xf32, #tpu.memory_space<smem>>
    %c3_70 = arith.constant 3 : index
    %c5_71 = arith.constant 5 : index
    %41 = memref.load %arg5[%c3_70, %c5_71] : memref<4x12xf32, #tpu.memory_space<smem>>
    %c3_72 = arith.constant 3 : index
    %c6_73 = arith.constant 6 : index
    %42 = memref.load %arg5[%c3_72, %c6_73] : memref<4x12xf32, #tpu.memory_space<smem>>
    %c3_74 = arith.constant 3 : index
    %c7_75 = arith.constant 7 : index
    %43 = memref.load %arg5[%c3_74, %c7_75] : memref<4x12xf32, #tpu.memory_space<smem>>
    %c3_76 = arith.constant 3 : index
    %c8_77 = arith.constant 8 : index
    %44 = memref.load %arg5[%c3_76, %c8_77] : memref<4x12xf32, #tpu.memory_space<smem>>
    %c3_78 = arith.constant 3 : index
    %c9_79 = arith.constant 9 : index
    %45 = memref.load %arg5[%c3_78, %c9_79] : memref<4x12xf32, #tpu.memory_space<smem>>
    %c3_80 = arith.constant 3 : index
    %c10_81 = arith.constant 10 : index
    %46 = memref.load %arg5[%c3_80, %c10_81] : memref<4x12xf32, #tpu.memory_space<smem>>
    %c3_82 = arith.constant 3 : index
    %c11_83 = arith.constant 11 : index
    %47 = memref.load %arg5[%c3_82, %c11_83] : memref<4x12xf32, #tpu.memory_space<smem>>
    %c0_84 = arith.constant 0 : index
    %48 = memref.load %arg6[%c0_84] : memref<4xf32, #tpu.memory_space<smem>>
    %c1_85 = arith.constant 1 : index
    %49 = memref.load %arg6[%c1_85] : memref<4xf32, #tpu.memory_space<smem>>
    %c2_86 = arith.constant 2 : index
    %50 = memref.load %arg6[%c2_86] : memref<4xf32, #tpu.memory_space<smem>>
    %c3_87 = arith.constant 3 : index
    %51 = memref.load %arg6[%c3_87] : memref<4xf32, #tpu.memory_space<smem>>
    %c0_88 = arith.constant 0 : index
    %c0_89 = arith.constant 0 : index
    %52 = memref.load %arg7[%c0_88, %c0_89] : memref<12x4xf32, #tpu.memory_space<smem>>
    %c0_90 = arith.constant 0 : index
    %c1_91 = arith.constant 1 : index
    %53 = memref.load %arg7[%c0_90, %c1_91] : memref<12x4xf32, #tpu.memory_space<smem>>
    %c0_92 = arith.constant 0 : index
    %c2_93 = arith.constant 2 : index
    %54 = memref.load %arg7[%c0_92, %c2_93] : memref<12x4xf32, #tpu.memory_space<smem>>
    %c0_94 = arith.constant 0 : index
    %c3_95 = arith.constant 3 : index
    %55 = memref.load %arg7[%c0_94, %c3_95] : memref<12x4xf32, #tpu.memory_space<smem>>
    %c1_96 = arith.constant 1 : index
    %c0_97 = arith.constant 0 : index
    %56 = memref.load %arg7[%c1_96, %c0_97] : memref<12x4xf32, #tpu.memory_space<smem>>
    %c1_98 = arith.constant 1 : index
    %c1_99 = arith.constant 1 : index
    %57 = memref.load %arg7[%c1_98, %c1_99] : memref<12x4xf32, #tpu.memory_space<smem>>
    %c1_100 = arith.constant 1 : index
    %c2_101 = arith.constant 2 : index
    %58 = memref.load %arg7[%c1_100, %c2_101] : memref<12x4xf32, #tpu.memory_space<smem>>
    %c1_102 = arith.constant 1 : index
    %c3_103 = arith.constant 3 : index
    %59 = memref.load %arg7[%c1_102, %c3_103] : memref<12x4xf32, #tpu.memory_space<smem>>
    %c2_104 = arith.constant 2 : index
    %c0_105 = arith.constant 0 : index
    %60 = memref.load %arg7[%c2_104, %c0_105] : memref<12x4xf32, #tpu.memory_space<smem>>
    %c2_106 = arith.constant 2 : index
    %c1_107 = arith.constant 1 : index
    %61 = memref.load %arg7[%c2_106, %c1_107] : memref<12x4xf32, #tpu.memory_space<smem>>
    %c2_108 = arith.constant 2 : index
    %c2_109 = arith.constant 2 : index
    %62 = memref.load %arg7[%c2_108, %c2_109] : memref<12x4xf32, #tpu.memory_space<smem>>
    %c2_110 = arith.constant 2 : index
    %c3_111 = arith.constant 3 : index
    %63 = memref.load %arg7[%c2_110, %c3_111] : memref<12x4xf32, #tpu.memory_space<smem>>
    %c3_112 = arith.constant 3 : index
    %c0_113 = arith.constant 0 : index
    %64 = memref.load %arg7[%c3_112, %c0_113] : memref<12x4xf32, #tpu.memory_space<smem>>
    %c3_114 = arith.constant 3 : index
    %c1_115 = arith.constant 1 : index
    %65 = memref.load %arg7[%c3_114, %c1_115] : memref<12x4xf32, #tpu.memory_space<smem>>
    %c3_116 = arith.constant 3 : index
    %c2_117 = arith.constant 2 : index
    %66 = memref.load %arg7[%c3_116, %c2_117] : memref<12x4xf32, #tpu.memory_space<smem>>
    %c3_118 = arith.constant 3 : index
    %c3_119 = arith.constant 3 : index
    %67 = memref.load %arg7[%c3_118, %c3_119] : memref<12x4xf32, #tpu.memory_space<smem>>
    %c4_120 = arith.constant 4 : index
    %c0_121 = arith.constant 0 : index
    %68 = memref.load %arg7[%c4_120, %c0_121] : memref<12x4xf32, #tpu.memory_space<smem>>
    %c4_122 = arith.constant 4 : index
    %c1_123 = arith.constant 1 : index
    %69 = memref.load %arg7[%c4_122, %c1_123] : memref<12x4xf32, #tpu.memory_space<smem>>
    %c4_124 = arith.constant 4 : index
    %c2_125 = arith.constant 2 : index
    %70 = memref.load %arg7[%c4_124, %c2_125] : memref<12x4xf32, #tpu.memory_space<smem>>
    %c4_126 = arith.constant 4 : index
    %c3_127 = arith.constant 3 : index
    %71 = memref.load %arg7[%c4_126, %c3_127] : memref<12x4xf32, #tpu.memory_space<smem>>
    %c5_128 = arith.constant 5 : index
    %c0_129 = arith.constant 0 : index
    %72 = memref.load %arg7[%c5_128, %c0_129] : memref<12x4xf32, #tpu.memory_space<smem>>
    %c5_130 = arith.constant 5 : index
    %c1_131 = arith.constant 1 : index
    %73 = memref.load %arg7[%c5_130, %c1_131] : memref<12x4xf32, #tpu.memory_space<smem>>
    %c5_132 = arith.constant 5 : index
    %c2_133 = arith.constant 2 : index
    %74 = memref.load %arg7[%c5_132, %c2_133] : memref<12x4xf32, #tpu.memory_space<smem>>
    %c5_134 = arith.constant 5 : index
    %c3_135 = arith.constant 3 : index
    %75 = memref.load %arg7[%c5_134, %c3_135] : memref<12x4xf32, #tpu.memory_space<smem>>
    %c6_136 = arith.constant 6 : index
    %c0_137 = arith.constant 0 : index
    %76 = memref.load %arg7[%c6_136, %c0_137] : memref<12x4xf32, #tpu.memory_space<smem>>
    %c6_138 = arith.constant 6 : index
    %c1_139 = arith.constant 1 : index
    %77 = memref.load %arg7[%c6_138, %c1_139] : memref<12x4xf32, #tpu.memory_space<smem>>
    %c6_140 = arith.constant 6 : index
    %c2_141 = arith.constant 2 : index
    %78 = memref.load %arg7[%c6_140, %c2_141] : memref<12x4xf32, #tpu.memory_space<smem>>
    %c6_142 = arith.constant 6 : index
    %c3_143 = arith.constant 3 : index
    %79 = memref.load %arg7[%c6_142, %c3_143] : memref<12x4xf32, #tpu.memory_space<smem>>
    %c7_144 = arith.constant 7 : index
    %c0_145 = arith.constant 0 : index
    %80 = memref.load %arg7[%c7_144, %c0_145] : memref<12x4xf32, #tpu.memory_space<smem>>
    %c7_146 = arith.constant 7 : index
    %c1_147 = arith.constant 1 : index
    %81 = memref.load %arg7[%c7_146, %c1_147] : memref<12x4xf32, #tpu.memory_space<smem>>
    %c7_148 = arith.constant 7 : index
    %c2_149 = arith.constant 2 : index
    %82 = memref.load %arg7[%c7_148, %c2_149] : memref<12x4xf32, #tpu.memory_space<smem>>
    %c7_150 = arith.constant 7 : index
    %c3_151 = arith.constant 3 : index
    %83 = memref.load %arg7[%c7_150, %c3_151] : memref<12x4xf32, #tpu.memory_space<smem>>
    %c8_152 = arith.constant 8 : index
    %c0_153 = arith.constant 0 : index
    %84 = memref.load %arg7[%c8_152, %c0_153] : memref<12x4xf32, #tpu.memory_space<smem>>
    %c8_154 = arith.constant 8 : index
    %c1_155 = arith.constant 1 : index
    %85 = memref.load %arg7[%c8_154, %c1_155] : memref<12x4xf32, #tpu.memory_space<smem>>
    %c8_156 = arith.constant 8 : index
    %c2_157 = arith.constant 2 : index
    %86 = memref.load %arg7[%c8_156, %c2_157] : memref<12x4xf32, #tpu.memory_space<smem>>
    %c8_158 = arith.constant 8 : index
    %c3_159 = arith.constant 3 : index
    %87 = memref.load %arg7[%c8_158, %c3_159] : memref<12x4xf32, #tpu.memory_space<smem>>
    %c9_160 = arith.constant 9 : index
    %c0_161 = arith.constant 0 : index
    %88 = memref.load %arg7[%c9_160, %c0_161] : memref<12x4xf32, #tpu.memory_space<smem>>
    %c9_162 = arith.constant 9 : index
    %c1_163 = arith.constant 1 : index
    %89 = memref.load %arg7[%c9_162, %c1_163] : memref<12x4xf32, #tpu.memory_space<smem>>
    %c9_164 = arith.constant 9 : index
    %c2_165 = arith.constant 2 : index
    %90 = memref.load %arg7[%c9_164, %c2_165] : memref<12x4xf32, #tpu.memory_space<smem>>
    %c9_166 = arith.constant 9 : index
    %c3_167 = arith.constant 3 : index
    %91 = memref.load %arg7[%c9_166, %c3_167] : memref<12x4xf32, #tpu.memory_space<smem>>
    %c10_168 = arith.constant 10 : index
    %c0_169 = arith.constant 0 : index
    %92 = memref.load %arg7[%c10_168, %c0_169] : memref<12x4xf32, #tpu.memory_space<smem>>
    %c10_170 = arith.constant 10 : index
    %c1_171 = arith.constant 1 : index
    %93 = memref.load %arg7[%c10_170, %c1_171] : memref<12x4xf32, #tpu.memory_space<smem>>
    %c10_172 = arith.constant 10 : index
    %c2_173 = arith.constant 2 : index
    %94 = memref.load %arg7[%c10_172, %c2_173] : memref<12x4xf32, #tpu.memory_space<smem>>
    %c10_174 = arith.constant 10 : index
    %c3_175 = arith.constant 3 : index
    %95 = memref.load %arg7[%c10_174, %c3_175] : memref<12x4xf32, #tpu.memory_space<smem>>
    %c11_176 = arith.constant 11 : index
    %c0_177 = arith.constant 0 : index
    %96 = memref.load %arg7[%c11_176, %c0_177] : memref<12x4xf32, #tpu.memory_space<smem>>
    %c11_178 = arith.constant 11 : index
    %c1_179 = arith.constant 1 : index
    %97 = memref.load %arg7[%c11_178, %c1_179] : memref<12x4xf32, #tpu.memory_space<smem>>
    %c11_180 = arith.constant 11 : index
    %c2_181 = arith.constant 2 : index
    %98 = memref.load %arg7[%c11_180, %c2_181] : memref<12x4xf32, #tpu.memory_space<smem>>
    %c11_182 = arith.constant 11 : index
    %c3_183 = arith.constant 3 : index
    %99 = memref.load %arg7[%c11_182, %c3_183] : memref<12x4xf32, #tpu.memory_space<smem>>
    %c0_184 = arith.constant 0 : index
    %100 = memref.load %arg8[%c0_184] : memref<12xf32, #tpu.memory_space<smem>>
    %c1_185 = arith.constant 1 : index
    %101 = memref.load %arg8[%c1_185] : memref<12xf32, #tpu.memory_space<smem>>
    %c2_186 = arith.constant 2 : index
    %102 = memref.load %arg8[%c2_186] : memref<12xf32, #tpu.memory_space<smem>>
    %c3_187 = arith.constant 3 : index
    %103 = memref.load %arg8[%c3_187] : memref<12xf32, #tpu.memory_space<smem>>
    %c4_188 = arith.constant 4 : index
    %104 = memref.load %arg8[%c4_188] : memref<12xf32, #tpu.memory_space<smem>>
    %c5_189 = arith.constant 5 : index
    %105 = memref.load %arg8[%c5_189] : memref<12xf32, #tpu.memory_space<smem>>
    %c6_190 = arith.constant 6 : index
    %106 = memref.load %arg8[%c6_190] : memref<12xf32, #tpu.memory_space<smem>>
    %c7_191 = arith.constant 7 : index
    %107 = memref.load %arg8[%c7_191] : memref<12xf32, #tpu.memory_space<smem>>
    %c8_192 = arith.constant 8 : index
    %108 = memref.load %arg8[%c8_192] : memref<12xf32, #tpu.memory_space<smem>>
    %c9_193 = arith.constant 9 : index
    %109 = memref.load %arg8[%c9_193] : memref<12xf32, #tpu.memory_space<smem>>
    %c10_194 = arith.constant 10 : index
    %110 = memref.load %arg8[%c10_194] : memref<12xf32, #tpu.memory_space<smem>>
    %c11_195 = arith.constant 11 : index
    %111 = memref.load %arg8[%c11_195] : memref<12xf32, #tpu.memory_space<smem>>
    %c0_i32 = arith.constant 0 : i32
    %c2_i32 = arith.constant 2 : i32
    %112 = arith.muli %c0_i32, %c2_i32 : i32
    %113 = tpu.assume_multiple %112, 2 : i32
    %c0_196 = arith.constant 0 : index
    %c0_197 = arith.constant 0 : index
    %114 = arith.index_cast %113 : i32 to index
    %c0_198 = arith.constant 0 : index
    %115 = vector.load %arg2[%c0_196, %c0_197, %114, %c0_198] : memref<1x4x2x128xf32, #tpu.memory_space<vmem>>, vector<1x1x2x128xf32>
    %116 = vector.shape_cast %115 : vector<1x1x2x128xf32> to vector<2x128xf32>
    %c0_199 = arith.constant 0 : index
    %c1_200 = arith.constant 1 : index
    %117 = arith.index_cast %113 : i32 to index
    %c0_201 = arith.constant 0 : index
    %118 = vector.load %arg2[%c0_199, %c1_200, %117, %c0_201] : memref<1x4x2x128xf32, #tpu.memory_space<vmem>>, vector<1x1x2x128xf32>
    %119 = vector.shape_cast %118 : vector<1x1x2x128xf32> to vector<2x128xf32>
    %c0_202 = arith.constant 0 : index
    %c2_203 = arith.constant 2 : index
    %120 = arith.index_cast %113 : i32 to index
    %c0_204 = arith.constant 0 : index
    %121 = vector.load %arg2[%c0_202, %c2_203, %120, %c0_204] : memref<1x4x2x128xf32, #tpu.memory_space<vmem>>, vector<1x1x2x128xf32>
    %122 = vector.shape_cast %121 : vector<1x1x2x128xf32> to vector<2x128xf32>
    %c0_205 = arith.constant 0 : index
    %c3_206 = arith.constant 3 : index
    %123 = arith.index_cast %113 : i32 to index
    %c0_207 = arith.constant 0 : index
    %124 = vector.load %arg2[%c0_205, %c3_206, %123, %c0_207] : memref<1x4x2x128xf32, #tpu.memory_space<vmem>>, vector<1x1x2x128xf32>
    %125 = vector.shape_cast %124 : vector<1x1x2x128xf32> to vector<2x128xf32>
    %c0_208 = arith.constant 0 : index
    %c0_209 = arith.constant 0 : index
    %126 = arith.index_cast %113 : i32 to index
    %c0_210 = arith.constant 0 : index
    %127 = vector.load %arg3[%c0_208, %c0_209, %126, %c0_210] : memref<1x4x2x128xf32, #tpu.memory_space<vmem>>, vector<1x1x2x128xf32>
    %128 = vector.shape_cast %127 : vector<1x1x2x128xf32> to vector<2x128xf32>
    %c0_211 = arith.constant 0 : index
    %c1_212 = arith.constant 1 : index
    %129 = arith.index_cast %113 : i32 to index
    %c0_213 = arith.constant 0 : index
    %130 = vector.load %arg3[%c0_211, %c1_212, %129, %c0_213] : memref<1x4x2x128xf32, #tpu.memory_space<vmem>>, vector<1x1x2x128xf32>
    %131 = vector.shape_cast %130 : vector<1x1x2x128xf32> to vector<2x128xf32>
    %c0_214 = arith.constant 0 : index
    %c2_215 = arith.constant 2 : index
    %132 = arith.index_cast %113 : i32 to index
    %c0_216 = arith.constant 0 : index
    %133 = vector.load %arg3[%c0_214, %c2_215, %132, %c0_216] : memref<1x4x2x128xf32, #tpu.memory_space<vmem>>, vector<1x1x2x128xf32>
    %134 = vector.shape_cast %133 : vector<1x1x2x128xf32> to vector<2x128xf32>
    %c0_217 = arith.constant 0 : index
    %c3_218 = arith.constant 3 : index
    %135 = arith.index_cast %113 : i32 to index
    %c0_219 = arith.constant 0 : index
    %136 = vector.load %arg3[%c0_217, %c3_218, %135, %c0_219] : memref<1x4x2x128xf32, #tpu.memory_space<vmem>>, vector<1x1x2x128xf32>
    %137 = vector.shape_cast %136 : vector<1x1x2x128xf32> to vector<2x128xf32>
    %c0_220 = arith.constant 0 : index
    %c0_221 = arith.constant 0 : index
    %138 = arith.index_cast %113 : i32 to index
    %c0_222 = arith.constant 0 : index
    %139 = vector.load %arg4[%c0_220, %c0_221, %138, %c0_222] : memref<1x4x2x128xf32, #tpu.memory_space<vmem>>, vector<1x1x2x128xf32>
    %140 = vector.shape_cast %139 : vector<1x1x2x128xf32> to vector<2x128xf32>
    %c0_223 = arith.constant 0 : index
    %c1_224 = arith.constant 1 : index
    %141 = arith.index_cast %113 : i32 to index
    %c0_225 = arith.constant 0 : index
    %142 = vector.load %arg4[%c0_223, %c1_224, %141, %c0_225] : memref<1x4x2x128xf32, #tpu.memory_space<vmem>>, vector<1x1x2x128xf32>
    %143 = vector.shape_cast %142 : vector<1x1x2x128xf32> to vector<2x128xf32>
    %c0_226 = arith.constant 0 : index
    %c2_227 = arith.constant 2 : index
    %144 = arith.index_cast %113 : i32 to index
    %c0_228 = arith.constant 0 : index
    %145 = vector.load %arg4[%c0_226, %c2_227, %144, %c0_228] : memref<1x4x2x128xf32, #tpu.memory_space<vmem>>, vector<1x1x2x128xf32>
    %146 = vector.shape_cast %145 : vector<1x1x2x128xf32> to vector<2x128xf32>
    %c0_229 = arith.constant 0 : index
    %c3_230 = arith.constant 3 : index
    %147 = arith.index_cast %113 : i32 to index
    %c0_231 = arith.constant 0 : index
    %148 = vector.load %arg4[%c0_229, %c3_230, %147, %c0_231] : memref<1x4x2x128xf32, #tpu.memory_space<vmem>>, vector<1x1x2x128xf32>
    %149 = vector.shape_cast %148 : vector<1x1x2x128xf32> to vector<2x128xf32>
    %150 = vector.broadcast %0 : f32 to vector<2x128xf32>
    %151 = arith.mulf %150, %116 : vector<2x128xf32>
    %152 = vector.broadcast %1 : f32 to vector<2x128xf32>
    %153 = arith.mulf %152, %119 : vector<2x128xf32>
    %154 = arith.addf %151, %153 : vector<2x128xf32>
    %155 = vector.broadcast %2 : f32 to vector<2x128xf32>
    %156 = arith.mulf %155, %122 : vector<2x128xf32>
    %157 = arith.addf %154, %156 : vector<2x128xf32>
    %158 = vector.broadcast %3 : f32 to vector<2x128xf32>
    %159 = arith.mulf %158, %125 : vector<2x128xf32>
    %160 = arith.addf %157, %159 : vector<2x128xf32>
    %161 = vector.broadcast %4 : f32 to vector<2x128xf32>
    %162 = arith.mulf %161, %128 : vector<2x128xf32>
    %163 = arith.addf %160, %162 : vector<2x128xf32>
    %164 = vector.broadcast %5 : f32 to vector<2x128xf32>
    %165 = arith.mulf %164, %131 : vector<2x128xf32>
    %166 = arith.addf %163, %165 : vector<2x128xf32>
    %167 = vector.broadcast %6 : f32 to vector<2x128xf32>
    %168 = arith.mulf %167, %134 : vector<2x128xf32>
    %169 = arith.addf %166, %168 : vector<2x128xf32>
    %170 = vector.broadcast %7 : f32 to vector<2x128xf32>
    %171 = arith.mulf %170, %137 : vector<2x128xf32>
    %172 = arith.addf %169, %171 : vector<2x128xf32>
    %173 = vector.broadcast %8 : f32 to vector<2x128xf32>
    %174 = arith.mulf %173, %140 : vector<2x128xf32>
    %175 = arith.addf %172, %174 : vector<2x128xf32>
    %176 = vector.broadcast %9 : f32 to vector<2x128xf32>
    %177 = arith.mulf %176, %143 : vector<2x128xf32>
    %178 = arith.addf %175, %177 : vector<2x128xf32>
    %179 = vector.broadcast %10 : f32 to vector<2x128xf32>
    %180 = arith.mulf %179, %146 : vector<2x128xf32>
    %181 = arith.addf %178, %180 : vector<2x128xf32>
    %182 = vector.broadcast %11 : f32 to vector<2x128xf32>
    %183 = arith.mulf %182, %149 : vector<2x128xf32>
    %184 = arith.addf %181, %183 : vector<2x128xf32>
    %185 = vector.broadcast %48 : f32 to vector<2x128xf32>
    %186 = arith.addf %184, %185 : vector<2x128xf32>
    %187 = vector.broadcast %12 : f32 to vector<2x128xf32>
    %188 = arith.mulf %187, %116 : vector<2x128xf32>
    %189 = vector.broadcast %13 : f32 to vector<2x128xf32>
    %190 = arith.mulf %189, %119 : vector<2x128xf32>
    %191 = arith.addf %188, %190 : vector<2x128xf32>
    %192 = vector.broadcast %14 : f32 to vector<2x128xf32>
    %193 = arith.mulf %192, %122 : vector<2x128xf32>
    %194 = arith.addf %191, %193 : vector<2x128xf32>
    %195 = vector.broadcast %15 : f32 to vector<2x128xf32>
    %196 = arith.mulf %195, %125 : vector<2x128xf32>
    %197 = arith.addf %194, %196 : vector<2x128xf32>
    %198 = vector.broadcast %16 : f32 to vector<2x128xf32>
    %199 = arith.mulf %198, %128 : vector<2x128xf32>
    %200 = arith.addf %197, %199 : vector<2x128xf32>
    %201 = vector.broadcast %17 : f32 to vector<2x128xf32>
    %202 = arith.mulf %201, %131 : vector<2x128xf32>
    %203 = arith.addf %200, %202 : vector<2x128xf32>
    %204 = vector.broadcast %18 : f32 to vector<2x128xf32>
    %205 = arith.mulf %204, %134 : vector<2x128xf32>
    %206 = arith.addf %203, %205 : vector<2x128xf32>
    %207 = vector.broadcast %19 : f32 to vector<2x128xf32>
    %208 = arith.mulf %207, %137 : vector<2x128xf32>
    %209 = arith.addf %206, %208 : vector<2x128xf32>
    %210 = vector.broadcast %20 : f32 to vector<2x128xf32>
    %211 = arith.mulf %210, %140 : vector<2x128xf32>
    %212 = arith.addf %209, %211 : vector<2x128xf32>
    %213 = vector.broadcast %21 : f32 to vector<2x128xf32>
    %214 = arith.mulf %213, %143 : vector<2x128xf32>
    %215 = arith.addf %212, %214 : vector<2x128xf32>
    %216 = vector.broadcast %22 : f32 to vector<2x128xf32>
    %217 = arith.mulf %216, %146 : vector<2x128xf32>
    %218 = arith.addf %215, %217 : vector<2x128xf32>
    %219 = vector.broadcast %23 : f32 to vector<2x128xf32>
    %220 = arith.mulf %219, %149 : vector<2x128xf32>
    %221 = arith.addf %218, %220 : vector<2x128xf32>
    %222 = vector.broadcast %49 : f32 to vector<2x128xf32>
    %223 = arith.addf %221, %222 : vector<2x128xf32>
    %224 = vector.broadcast %24 : f32 to vector<2x128xf32>
    %225 = arith.mulf %224, %116 : vector<2x128xf32>
    %226 = vector.broadcast %25 : f32 to vector<2x128xf32>
    %227 = arith.mulf %226, %119 : vector<2x128xf32>
    %228 = arith.addf %225, %227 : vector<2x128xf32>
    %229 = vector.broadcast %26 : f32 to vector<2x128xf32>
    %230 = arith.mulf %229, %122 : vector<2x128xf32>
    %231 = arith.addf %228, %230 : vector<2x128xf32>
    %232 = vector.broadcast %27 : f32 to vector<2x128xf32>
    %233 = arith.mulf %232, %125 : vector<2x128xf32>
    %234 = arith.addf %231, %233 : vector<2x128xf32>
    %235 = vector.broadcast %28 : f32 to vector<2x128xf32>
    %236 = arith.mulf %235, %128 : vector<2x128xf32>
    %237 = arith.addf %234, %236 : vector<2x128xf32>
    %238 = vector.broadcast %29 : f32 to vector<2x128xf32>
    %239 = arith.mulf %238, %131 : vector<2x128xf32>
    %240 = arith.addf %237, %239 : vector<2x128xf32>
    %241 = vector.broadcast %30 : f32 to vector<2x128xf32>
    %242 = arith.mulf %241, %134 : vector<2x128xf32>
    %243 = arith.addf %240, %242 : vector<2x128xf32>
    %244 = vector.broadcast %31 : f32 to vector<2x128xf32>
    %245 = arith.mulf %244, %137 : vector<2x128xf32>
    %246 = arith.addf %243, %245 : vector<2x128xf32>
    %247 = vector.broadcast %32 : f32 to vector<2x128xf32>
    %248 = arith.mulf %247, %140 : vector<2x128xf32>
    %249 = arith.addf %246, %248 : vector<2x128xf32>
    %250 = vector.broadcast %33 : f32 to vector<2x128xf32>
    %251 = arith.mulf %250, %143 : vector<2x128xf32>
    %252 = arith.addf %249, %251 : vector<2x128xf32>
    %253 = vector.broadcast %34 : f32 to vector<2x128xf32>
    %254 = arith.mulf %253, %146 : vector<2x128xf32>
    %255 = arith.addf %252, %254 : vector<2x128xf32>
    %256 = vector.broadcast %35 : f32 to vector<2x128xf32>
    %257 = arith.mulf %256, %149 : vector<2x128xf32>
    %258 = arith.addf %255, %257 : vector<2x128xf32>
    %259 = vector.broadcast %50 : f32 to vector<2x128xf32>
    %260 = arith.addf %258, %259 : vector<2x128xf32>
    %261 = vector.broadcast %36 : f32 to vector<2x128xf32>
    %262 = arith.mulf %261, %116 : vector<2x128xf32>
    %263 = vector.broadcast %37 : f32 to vector<2x128xf32>
    %264 = arith.mulf %263, %119 : vector<2x128xf32>
    %265 = arith.addf %262, %264 : vector<2x128xf32>
    %266 = vector.broadcast %38 : f32 to vector<2x128xf32>
    %267 = arith.mulf %266, %122 : vector<2x128xf32>
    %268 = arith.addf %265, %267 : vector<2x128xf32>
    %269 = vector.broadcast %39 : f32 to vector<2x128xf32>
    %270 = arith.mulf %269, %125 : vector<2x128xf32>
    %271 = arith.addf %268, %270 : vector<2x128xf32>
    %272 = vector.broadcast %40 : f32 to vector<2x128xf32>
    %273 = arith.mulf %272, %128 : vector<2x128xf32>
    %274 = arith.addf %271, %273 : vector<2x128xf32>
    %275 = vector.broadcast %41 : f32 to vector<2x128xf32>
    %276 = arith.mulf %275, %131 : vector<2x128xf32>
    %277 = arith.addf %274, %276 : vector<2x128xf32>
    %278 = vector.broadcast %42 : f32 to vector<2x128xf32>
    %279 = arith.mulf %278, %134 : vector<2x128xf32>
    %280 = arith.addf %277, %279 : vector<2x128xf32>
    %281 = vector.broadcast %43 : f32 to vector<2x128xf32>
    %282 = arith.mulf %281, %137 : vector<2x128xf32>
    %283 = arith.addf %280, %282 : vector<2x128xf32>
    %284 = vector.broadcast %44 : f32 to vector<2x128xf32>
    %285 = arith.mulf %284, %140 : vector<2x128xf32>
    %286 = arith.addf %283, %285 : vector<2x128xf32>
    %287 = vector.broadcast %45 : f32 to vector<2x128xf32>
    %288 = arith.mulf %287, %143 : vector<2x128xf32>
    %289 = arith.addf %286, %288 : vector<2x128xf32>
    %290 = vector.broadcast %46 : f32 to vector<2x128xf32>
    %291 = arith.mulf %290, %146 : vector<2x128xf32>
    %292 = arith.addf %289, %291 : vector<2x128xf32>
    %293 = vector.broadcast %47 : f32 to vector<2x128xf32>
    %294 = arith.mulf %293, %149 : vector<2x128xf32>
    %295 = arith.addf %292, %294 : vector<2x128xf32>
    %296 = vector.broadcast %51 : f32 to vector<2x128xf32>
    %297 = arith.addf %295, %296 : vector<2x128xf32>
    %298 = vector.broadcast %52 : f32 to vector<2x128xf32>
    %299 = arith.mulf %298, %186 : vector<2x128xf32>
    %300 = vector.broadcast %53 : f32 to vector<2x128xf32>
    %301 = arith.mulf %300, %223 : vector<2x128xf32>
    %302 = arith.addf %299, %301 : vector<2x128xf32>
    %303 = vector.broadcast %54 : f32 to vector<2x128xf32>
    %304 = arith.mulf %303, %260 : vector<2x128xf32>
    %305 = arith.addf %302, %304 : vector<2x128xf32>
    %306 = vector.broadcast %55 : f32 to vector<2x128xf32>
    %307 = arith.mulf %306, %297 : vector<2x128xf32>
    %308 = arith.addf %305, %307 : vector<2x128xf32>
    %309 = vector.broadcast %100 : f32 to vector<2x128xf32>
    %310 = arith.addf %308, %309 : vector<2x128xf32>
    %311 = arith.negf %310 : vector<2x128xf32>
    %312 = math.exp %311 : vector<2x128xf32>
    %cst = arith.constant 1.000000e+00 : f32
    %313 = vector.broadcast %cst : f32 to vector<2x128xf32>
    %314 = arith.addf %313, %312 : vector<2x128xf32>
    %315 = arith.divf %313, %314 : vector<2x128xf32>
    %316 = vector.broadcast %56 : f32 to vector<2x128xf32>
    %317 = arith.mulf %316, %186 : vector<2x128xf32>
    %318 = vector.broadcast %57 : f32 to vector<2x128xf32>
    %319 = arith.mulf %318, %223 : vector<2x128xf32>
    %320 = arith.addf %317, %319 : vector<2x128xf32>
    %321 = vector.broadcast %58 : f32 to vector<2x128xf32>
    %322 = arith.mulf %321, %260 : vector<2x128xf32>
    %323 = arith.addf %320, %322 : vector<2x128xf32>
    %324 = vector.broadcast %59 : f32 to vector<2x128xf32>
    %325 = arith.mulf %324, %297 : vector<2x128xf32>
    %326 = arith.addf %323, %325 : vector<2x128xf32>
    %327 = vector.broadcast %101 : f32 to vector<2x128xf32>
    %328 = arith.addf %326, %327 : vector<2x128xf32>
    %329 = arith.negf %328 : vector<2x128xf32>
    %330 = math.exp %329 : vector<2x128xf32>
    %cst_232 = arith.constant 1.000000e+00 : f32
    %331 = vector.broadcast %cst_232 : f32 to vector<2x128xf32>
    %332 = arith.addf %331, %330 : vector<2x128xf32>
    %333 = arith.divf %331, %332 : vector<2x128xf32>
    %334 = vector.broadcast %60 : f32 to vector<2x128xf32>
    %335 = arith.mulf %334, %186 : vector<2x128xf32>
    %336 = vector.broadcast %61 : f32 to vector<2x128xf32>
    %337 = arith.mulf %336, %223 : vector<2x128xf32>
    %338 = arith.addf %335, %337 : vector<2x128xf32>
    %339 = vector.broadcast %62 : f32 to vector<2x128xf32>
    %340 = arith.mulf %339, %260 : vector<2x128xf32>
    %341 = arith.addf %338, %340 : vector<2x128xf32>
    %342 = vector.broadcast %63 : f32 to vector<2x128xf32>
    %343 = arith.mulf %342, %297 : vector<2x128xf32>
    %344 = arith.addf %341, %343 : vector<2x128xf32>
    %345 = vector.broadcast %102 : f32 to vector<2x128xf32>
    %346 = arith.addf %344, %345 : vector<2x128xf32>
    %347 = arith.negf %346 : vector<2x128xf32>
    %348 = math.exp %347 : vector<2x128xf32>
    %cst_233 = arith.constant 1.000000e+00 : f32
    %349 = vector.broadcast %cst_233 : f32 to vector<2x128xf32>
    %350 = arith.addf %349, %348 : vector<2x128xf32>
    %351 = arith.divf %349, %350 : vector<2x128xf32>
    %352 = vector.broadcast %64 : f32 to vector<2x128xf32>
    %353 = arith.mulf %352, %186 : vector<2x128xf32>
    %354 = vector.broadcast %65 : f32 to vector<2x128xf32>
    %355 = arith.mulf %354, %223 : vector<2x128xf32>
    %356 = arith.addf %353, %355 : vector<2x128xf32>
    %357 = vector.broadcast %66 : f32 to vector<2x128xf32>
    %358 = arith.mulf %357, %260 : vector<2x128xf32>
    %359 = arith.addf %356, %358 : vector<2x128xf32>
    %360 = vector.broadcast %67 : f32 to vector<2x128xf32>
    %361 = arith.mulf %360, %297 : vector<2x128xf32>
    %362 = arith.addf %359, %361 : vector<2x128xf32>
    %363 = vector.broadcast %103 : f32 to vector<2x128xf32>
    %364 = arith.addf %362, %363 : vector<2x128xf32>
    %365 = arith.negf %364 : vector<2x128xf32>
    %366 = math.exp %365 : vector<2x128xf32>
    %cst_234 = arith.constant 1.000000e+00 : f32
    %367 = vector.broadcast %cst_234 : f32 to vector<2x128xf32>
    %368 = arith.addf %367, %366 : vector<2x128xf32>
    %369 = arith.divf %367, %368 : vector<2x128xf32>
    %370 = vector.broadcast %68 : f32 to vector<2x128xf32>
    %371 = arith.mulf %370, %186 : vector<2x128xf32>
    %372 = vector.broadcast %69 : f32 to vector<2x128xf32>
    %373 = arith.mulf %372, %223 : vector<2x128xf32>
    %374 = arith.addf %371, %373 : vector<2x128xf32>
    %375 = vector.broadcast %70 : f32 to vector<2x128xf32>
    %376 = arith.mulf %375, %260 : vector<2x128xf32>
    %377 = arith.addf %374, %376 : vector<2x128xf32>
    %378 = vector.broadcast %71 : f32 to vector<2x128xf32>
    %379 = arith.mulf %378, %297 : vector<2x128xf32>
    %380 = arith.addf %377, %379 : vector<2x128xf32>
    %381 = vector.broadcast %104 : f32 to vector<2x128xf32>
    %382 = arith.addf %380, %381 : vector<2x128xf32>
    %383 = arith.negf %382 : vector<2x128xf32>
    %384 = math.exp %383 : vector<2x128xf32>
    %cst_235 = arith.constant 1.000000e+00 : f32
    %385 = vector.broadcast %cst_235 : f32 to vector<2x128xf32>
    %386 = arith.addf %385, %384 : vector<2x128xf32>
    %387 = arith.divf %385, %386 : vector<2x128xf32>
    %388 = vector.broadcast %72 : f32 to vector<2x128xf32>
    %389 = arith.mulf %388, %186 : vector<2x128xf32>
    %390 = vector.broadcast %73 : f32 to vector<2x128xf32>
    %391 = arith.mulf %390, %223 : vector<2x128xf32>
    %392 = arith.addf %389, %391 : vector<2x128xf32>
    %393 = vector.broadcast %74 : f32 to vector<2x128xf32>
    %394 = arith.mulf %393, %260 : vector<2x128xf32>
    %395 = arith.addf %392, %394 : vector<2x128xf32>
    %396 = vector.broadcast %75 : f32 to vector<2x128xf32>
    %397 = arith.mulf %396, %297 : vector<2x128xf32>
    %398 = arith.addf %395, %397 : vector<2x128xf32>
    %399 = vector.broadcast %105 : f32 to vector<2x128xf32>
    %400 = arith.addf %398, %399 : vector<2x128xf32>
    %401 = arith.negf %400 : vector<2x128xf32>
    %402 = math.exp %401 : vector<2x128xf32>
    %cst_236 = arith.constant 1.000000e+00 : f32
    %403 = vector.broadcast %cst_236 : f32 to vector<2x128xf32>
    %404 = arith.addf %403, %402 : vector<2x128xf32>
    %405 = arith.divf %403, %404 : vector<2x128xf32>
    %406 = vector.broadcast %76 : f32 to vector<2x128xf32>
    %407 = arith.mulf %406, %186 : vector<2x128xf32>
    %408 = vector.broadcast %77 : f32 to vector<2x128xf32>
    %409 = arith.mulf %408, %223 : vector<2x128xf32>
    %410 = arith.addf %407, %409 : vector<2x128xf32>
    %411 = vector.broadcast %78 : f32 to vector<2x128xf32>
    %412 = arith.mulf %411, %260 : vector<2x128xf32>
    %413 = arith.addf %410, %412 : vector<2x128xf32>
    %414 = vector.broadcast %79 : f32 to vector<2x128xf32>
    %415 = arith.mulf %414, %297 : vector<2x128xf32>
    %416 = arith.addf %413, %415 : vector<2x128xf32>
    %417 = vector.broadcast %106 : f32 to vector<2x128xf32>
    %418 = arith.addf %416, %417 : vector<2x128xf32>
    %419 = arith.negf %418 : vector<2x128xf32>
    %420 = math.exp %419 : vector<2x128xf32>
    %cst_237 = arith.constant 1.000000e+00 : f32
    %421 = vector.broadcast %cst_237 : f32 to vector<2x128xf32>
    %422 = arith.addf %421, %420 : vector<2x128xf32>
    %423 = arith.divf %421, %422 : vector<2x128xf32>
    %424 = vector.broadcast %80 : f32 to vector<2x128xf32>
    %425 = arith.mulf %424, %186 : vector<2x128xf32>
    %426 = vector.broadcast %81 : f32 to vector<2x128xf32>
    %427 = arith.mulf %426, %223 : vector<2x128xf32>
    %428 = arith.addf %425, %427 : vector<2x128xf32>
    %429 = vector.broadcast %82 : f32 to vector<2x128xf32>
    %430 = arith.mulf %429, %260 : vector<2x128xf32>
    %431 = arith.addf %428, %430 : vector<2x128xf32>
    %432 = vector.broadcast %83 : f32 to vector<2x128xf32>
    %433 = arith.mulf %432, %297 : vector<2x128xf32>
    %434 = arith.addf %431, %433 : vector<2x128xf32>
    %435 = vector.broadcast %107 : f32 to vector<2x128xf32>
    %436 = arith.addf %434, %435 : vector<2x128xf32>
    %437 = arith.negf %436 : vector<2x128xf32>
    %438 = math.exp %437 : vector<2x128xf32>
    %cst_238 = arith.constant 1.000000e+00 : f32
    %439 = vector.broadcast %cst_238 : f32 to vector<2x128xf32>
    %440 = arith.addf %439, %438 : vector<2x128xf32>
    %441 = arith.divf %439, %440 : vector<2x128xf32>
    %442 = vector.broadcast %84 : f32 to vector<2x128xf32>
    %443 = arith.mulf %442, %186 : vector<2x128xf32>
    %444 = vector.broadcast %85 : f32 to vector<2x128xf32>
    %445 = arith.mulf %444, %223 : vector<2x128xf32>
    %446 = arith.addf %443, %445 : vector<2x128xf32>
    %447 = vector.broadcast %86 : f32 to vector<2x128xf32>
    %448 = arith.mulf %447, %260 : vector<2x128xf32>
    %449 = arith.addf %446, %448 : vector<2x128xf32>
    %450 = vector.broadcast %87 : f32 to vector<2x128xf32>
    %451 = arith.mulf %450, %297 : vector<2x128xf32>
    %452 = arith.addf %449, %451 : vector<2x128xf32>
    %453 = vector.broadcast %108 : f32 to vector<2x128xf32>
    %454 = arith.addf %452, %453 : vector<2x128xf32>
    %455 = arith.negf %454 : vector<2x128xf32>
    %456 = math.exp %455 : vector<2x128xf32>
    %cst_239 = arith.constant 1.000000e+00 : f32
    %457 = vector.broadcast %cst_239 : f32 to vector<2x128xf32>
    %458 = arith.addf %457, %456 : vector<2x128xf32>
    %459 = arith.divf %457, %458 : vector<2x128xf32>
    %460 = vector.broadcast %88 : f32 to vector<2x128xf32>
    %461 = arith.mulf %460, %186 : vector<2x128xf32>
    %462 = vector.broadcast %89 : f32 to vector<2x128xf32>
    %463 = arith.mulf %462, %223 : vector<2x128xf32>
    %464 = arith.addf %461, %463 : vector<2x128xf32>
    %465 = vector.broadcast %90 : f32 to vector<2x128xf32>
    %466 = arith.mulf %465, %260 : vector<2x128xf32>
    %467 = arith.addf %464, %466 : vector<2x128xf32>
    %468 = vector.broadcast %91 : f32 to vector<2x128xf32>
    %469 = arith.mulf %468, %297 : vector<2x128xf32>
    %470 = arith.addf %467, %469 : vector<2x128xf32>
    %471 = vector.broadcast %109 : f32 to vector<2x128xf32>
    %472 = arith.addf %470, %471 : vector<2x128xf32>
    %473 = arith.negf %472 : vector<2x128xf32>
    %474 = math.exp %473 : vector<2x128xf32>
    %cst_240 = arith.constant 1.000000e+00 : f32
    %475 = vector.broadcast %cst_240 : f32 to vector<2x128xf32>
    %476 = arith.addf %475, %474 : vector<2x128xf32>
    %477 = arith.divf %475, %476 : vector<2x128xf32>
    %478 = vector.broadcast %92 : f32 to vector<2x128xf32>
    %479 = arith.mulf %478, %186 : vector<2x128xf32>
    %480 = vector.broadcast %93 : f32 to vector<2x128xf32>
    %481 = arith.mulf %480, %223 : vector<2x128xf32>
    %482 = arith.addf %479, %481 : vector<2x128xf32>
    %483 = vector.broadcast %94 : f32 to vector<2x128xf32>
    %484 = arith.mulf %483, %260 : vector<2x128xf32>
    %485 = arith.addf %482, %484 : vector<2x128xf32>
    %486 = vector.broadcast %95 : f32 to vector<2x128xf32>
    %487 = arith.mulf %486, %297 : vector<2x128xf32>
    %488 = arith.addf %485, %487 : vector<2x128xf32>
    %489 = vector.broadcast %110 : f32 to vector<2x128xf32>
    %490 = arith.addf %488, %489 : vector<2x128xf32>
    %491 = arith.negf %490 : vector<2x128xf32>
    %492 = math.exp %491 : vector<2x128xf32>
    %cst_241 = arith.constant 1.000000e+00 : f32
    %493 = vector.broadcast %cst_241 : f32 to vector<2x128xf32>
    %494 = arith.addf %493, %492 : vector<2x128xf32>
    %495 = arith.divf %493, %494 : vector<2x128xf32>
    %496 = vector.broadcast %96 : f32 to vector<2x128xf32>
    %497 = arith.mulf %496, %186 : vector<2x128xf32>
    %498 = vector.broadcast %97 : f32 to vector<2x128xf32>
    %499 = arith.mulf %498, %223 : vector<2x128xf32>
    %500 = arith.addf %497, %499 : vector<2x128xf32>
    %501 = vector.broadcast %98 : f32 to vector<2x128xf32>
    %502 = arith.mulf %501, %260 : vector<2x128xf32>
    %503 = arith.addf %500, %502 : vector<2x128xf32>
    %504 = vector.broadcast %99 : f32 to vector<2x128xf32>
    %505 = arith.mulf %504, %297 : vector<2x128xf32>
    %506 = arith.addf %503, %505 : vector<2x128xf32>
    %507 = vector.broadcast %111 : f32 to vector<2x128xf32>
    %508 = arith.addf %506, %507 : vector<2x128xf32>
    %509 = arith.negf %508 : vector<2x128xf32>
    %510 = math.exp %509 : vector<2x128xf32>
    %cst_242 = arith.constant 1.000000e+00 : f32
    %511 = vector.broadcast %cst_242 : f32 to vector<2x128xf32>
    %512 = arith.addf %511, %510 : vector<2x128xf32>
    %513 = arith.divf %511, %512 : vector<2x128xf32>
    %514 = arith.mulf %315, %116 : vector<2x128xf32>
    %515 = arith.mulf %387, %128 : vector<2x128xf32>
    %516 = arith.addf %514, %515 : vector<2x128xf32>
    %517 = arith.mulf %459, %140 : vector<2x128xf32>
    %518 = arith.addf %516, %517 : vector<2x128xf32>
    %c0_243 = arith.constant 0 : index
    %c0_244 = arith.constant 0 : index
    %519 = arith.index_cast %113 : i32 to index
    %c0_245 = arith.constant 0 : index
    %520 = vector.load %arg9[%c0_243, %c0_244, %519, %c0_245] : memref<1x4x2x128xf32, #tpu.memory_space<vmem>>, vector<1x1x2x128xf32>
    %521 = vector.shape_cast %520 : vector<1x1x2x128xf32> to vector<2x128xf32>
    %522 = vector.shape_cast %518 : vector<2x128xf32> to vector<1x1x2x128xf32>
    tpu.vector_store %arg9[%c0_243, %c0_244, %519, %c0_245], %522 {strides = array<i32>} : memref<1x4x2x128xf32, #tpu.memory_space<vmem>>, vector<1x1x2x128xf32>,
    %523 = arith.mulf %333, %119 : vector<2x128xf32>
    %524 = arith.mulf %405, %131 : vector<2x128xf32>
    %525 = arith.addf %523, %524 : vector<2x128xf32>
    %526 = arith.mulf %477, %143 : vector<2x128xf32>
    %527 = arith.addf %525, %526 : vector<2x128xf32>
    %c0_246 = arith.constant 0 : index
    %c1_247 = arith.constant 1 : index
    %528 = arith.index_cast %113 : i32 to index
    %c0_248 = arith.constant 0 : index
    %529 = vector.load %arg9[%c0_246, %c1_247, %528, %c0_248] : memref<1x4x2x128xf32, #tpu.memory_space<vmem>>, vector<1x1x2x128xf32>
    %530 = vector.shape_cast %529 : vector<1x1x2x128xf32> to vector<2x128xf32>
    %531 = vector.shape_cast %527 : vector<2x128xf32> to vector<1x1x2x128xf32>
    tpu.vector_store %arg9[%c0_246, %c1_247, %528, %c0_248], %531 {strides = array<i32>} : memref<1x4x2x128xf32, #tpu.memory_space<vmem>>, vector<1x1x2x128xf32>,
    %532 = arith.mulf %351, %122 : vector<2x128xf32>
    %533 = arith.mulf %423, %134 : vector<2x128xf32>
    %534 = arith.addf %532, %533 : vector<2x128xf32>
    %535 = arith.mulf %495, %146 : vector<2x128xf32>
    %536 = arith.addf %534, %535 : vector<2x128xf32>
    %c0_249 = arith.constant 0 : index
    %c2_250 = arith.constant 2 : index
    %537 = arith.index_cast %113 : i32 to index
    %c0_251 = arith.constant 0 : index
    %538 = vector.load %arg9[%c0_249, %c2_250, %537, %c0_251] : memref<1x4x2x128xf32, #tpu.memory_space<vmem>>, vector<1x1x2x128xf32>
    %539 = vector.shape_cast %538 : vector<1x1x2x128xf32> to vector<2x128xf32>
    %540 = vector.shape_cast %536 : vector<2x128xf32> to vector<1x1x2x128xf32>
    tpu.vector_store %arg9[%c0_249, %c2_250, %537, %c0_251], %540 {strides = array<i32>} : memref<1x4x2x128xf32, #tpu.memory_space<vmem>>, vector<1x1x2x128xf32>,
    %541 = arith.mulf %369, %125 : vector<2x128xf32>
    %542 = arith.mulf %441, %137 : vector<2x128xf32>
    %543 = arith.addf %541, %542 : vector<2x128xf32>
    %544 = arith.mulf %513, %149 : vector<2x128xf32>
    %545 = arith.addf %543, %544 : vector<2x128xf32>
    %c0_252 = arith.constant 0 : index
    %c3_253 = arith.constant 3 : index
    %546 = arith.index_cast %113 : i32 to index
    %c0_254 = arith.constant 0 : index
    %547 = vector.load %arg9[%c0_252, %c3_253, %546, %c0_254] : memref<1x4x2x128xf32, #tpu.memory_space<vmem>>, vector<1x1x2x128xf32>
    %548 = vector.shape_cast %547 : vector<1x1x2x128xf32> to vector<2x128xf32>
    %549 = vector.shape_cast %545 : vector<2x128xf32> to vector<1x1x2x128xf32>
    tpu.vector_store %arg9[%c0_252, %c3_253, %546, %c0_254], %549 {strides = array<i32>} : memref<1x4x2x128xf32, #tpu.memory_space<vmem>>, vector<1x1x2x128xf32>,
    %c1_i32 = arith.constant 1 : i32
    return
  }
  func.func @transform_0(%arg0: i32, %arg1: i32) -> (i32, i32, i32, i32) {
    %c0_i32 = arith.constant 0 : i32
    %c0_i32_0 = arith.constant 0 : i32
    %c0_i32_1 = arith.constant 0 : i32
    return %arg0, %c0_i32, %arg1, %c0_i32_0 : i32, i32, i32, i32
  }
  func.func @transform_1(%arg0: i32, %arg1: i32) -> (i32, i32, i32, i32) {
    %c0_i32 = arith.constant 0 : i32
    %c0_i32_0 = arith.constant 0 : i32
    %c0_i32_1 = arith.constant 0 : i32
    return %arg0, %c0_i32, %arg1, %c0_i32_0 : i32, i32, i32, i32
  }
  func.func @transform_2(%arg0: i32, %arg1: i32) -> (i32, i32, i32, i32) {
    %c0_i32 = arith.constant 0 : i32
    %c0_i32_0 = arith.constant 0 : i32
    %c0_i32_1 = arith.constant 0 : i32
    return %arg0, %c0_i32, %arg1, %c0_i32_0 : i32, i32, i32, i32
  }
  func.func @transform_3(%arg0: i32, %arg1: i32) -> (i32, i32) {
    %c0_i32 = arith.constant 0 : i32
    %c0_i32_0 = arith.constant 0 : i32
    %c0_i32_1 = arith.constant 0 : i32
    return %c0_i32, %c0_i32_0 : i32, i32
  }
  func.func @transform_4(%arg0: i32, %arg1: i32) -> i32 {
    %c0_i32 = arith.constant 0 : i32
    %c0_i32_0 = arith.constant 0 : i32
    return %c0_i32 : i32
  }
  func.func @transform_5(%arg0: i32, %arg1: i32) -> (i32, i32) {
    %c0_i32 = arith.constant 0 : i32
    %c0_i32_0 = arith.constant 0 : i32
    %c0_i32_1 = arith.constant 0 : i32
    return %c0_i32, %c0_i32_0 : i32, i32
  }
  func.func @transform_6(%arg0: i32, %arg1: i32) -> i32 {
    %c0_i32 = arith.constant 0 : i32
    %c0_i32_0 = arith.constant 0 : i32
    return %c0_i32 : i32
  }
  func.func @transform_7(%arg0: i32, %arg1: i32) -> (i32, i32, i32, i32) {
    %c0_i32 = arith.constant 0 : i32
    %c0_i32_0 = arith.constant 0 : i32
    %c0_i32_1 = arith.constant 0 : i32
    return %arg0, %c0_i32, %arg1, %c0_i32_0 : i32, i32, i32, i32
  }
}

</mosaic_0001>

<llo_original>
// kernel: tpu_custom_call.1
$region0: #{tpu_custom_call.1}
  #allocation0 [shape = 'u32[]', space=smem, size = 0x4, offset = 0x4, fixed_abs, tag = 'smem constant byte address 0x4 - core index']
  #allocation1 [shape = 'u32[144,128]{1,0:T(1,128)}', space=vmem, size = 0x12000, scoped, tag = 'internal scratch']
  %s0 = inlined_call_operand.vmem [shape: f32[2,4,2,128], index: 0, kind: input, shape index: {}]
  %s1 = inlined_call_operand.hbm [shape: f32[2,4,2,128], index: 1, kind: input, shape index: {}]
  %s2 = inlined_call_operand.hbm [shape: f32[2,4,2,128], index: 2, kind: input, shape index: {}]
  %s3 = inlined_call_operand.vmem [shape: f32[4,12], index: 3, kind: input, shape index: {}]
  %s4 = inlined_call_operand.vmem [shape: f32[4], index: 4, kind: input, shape index: {}]
  %s5 = inlined_call_operand.vmem [shape: f32[12,4], index: 5, kind: input, shape index: {}]
  %s6 = inlined_call_operand.vmem [shape: f32[12], index: 6, kind: input, shape index: {}]
  %s7 = inlined_call_operand.hbm [shape: f32[2,4,2,128], index: 7, kind: output, shape index: {}]
  %s8 = sld [smem:[#allocation0]]
  $region85: #{tpu_custom_call.1} parent=0
    _
  %s10 = ssub.s32 1, %s8
  %s11 = scalar_select 0, %s10, %s8
  $region1: #{tpu_custom_call.1} parent=0
    #allocation2 [shape = 'u8[8192]{0}', space=vmem, size = 0x2000, scoped, tag = 'input window, operand 1']
    #allocation3 [shape = 's32[2]{0}', space=sflag, size = 0x8, scoped, tag = 'scoped memory for tpu_custom_call.1']
    #allocation4 [shape = 's32[2]{0}', space=sflag, size = 0x8, scoped, tag = 'scoped memory for tpu_custom_call.1']
    #allocation5 [shape = 's32[2]{0}', space=sflag, size = 0x8, scoped, tag = 'scoped memory for tpu_custom_call.1']
    #allocation6 [shape = 'u8[8192]{0}', space=vmem, size = 0x2000, scoped, tag = 'input window, operand 2']
    #allocation7 [shape = 's32[2]{0}', space=sflag, size = 0x8, scoped, tag = 'scoped memory for tpu_custom_call.1']
    #allocation8 [shape = 'u8[2048]{0}', space=smem, size = 0x800, scoped, tag = 'input window, operand 3, single buffered']
    #allocation9 [shape = 'u8[512]{0}', space=smem, size = 0x200, scoped, tag = 'input window, operand 4, single buffered']
    #allocation10 [shape = 's32[1]{0}', space=sflag, size = 0x4, scoped, tag = 'scoped memory for tpu_custom_call.1']
    #allocation11 [shape = 'u8[8192]{0}', space=smem, size = 0x2000, scoped, tag = 'input window, operand 5, single buffered']
    #allocation12 [shape = 'u8[512]{0}', space=smem, size = 0x200, scoped, tag = 'input window, operand 6, single buffered']
    #allocation13 [shape = 's32[1]{0}', space=sflag, size = 0x4, scoped, tag = 'scoped memory for tpu_custom_call.1']
    #allocation14 [shape = 'u8[8192]{0}', space=vmem, size = 0x2000, scoped, tag = 'output window, operand 0']
    %12 = vsyncpa [#allocation3], 0
    %s13 = scalar_lea.sflag [#allocation3], 1
    %14 = vsyncpa %s13, 0
    %15 = vsyncpa [#allocation7], 0
    %s16 = scalar_lea.sflag [#allocation7], 1
    %17 = vsyncpa %s16, 0
    %18 = vsyncpa [#allocation5], 0
    %19 = vsyncpa [#allocation10], 0
    %20 = vsyncpa [#allocation13], 0
    %21 = vsyncpa [#allocation4], 0
    %s22 = scalar_lea.sflag [#allocation4], 1
    %23 = vsyncpa %s22, 0
    loop: start=0, step=1, limit=4
    $region2: #{tpu_custom_call.1} parent=1 // loop_pre_header
      _
    $region3: #{tpu_custom_call.1} parent=1 // loop_header
      %s25 = sphi 0, %s29
      %p26 = scmp.ge.s32.totalorder %s25, 4
      %s32 = sphi 0, %s44
      %s33 = sphi 0, %s40
      %s34 = sphi 0, %s32
      %s35 = sphi 0, %s33
      %s36 = sphi 0, %s34
      %s37 = sphi 0, %s35
      %s49 = sphi 0, %s51
      %s52 = sphi 0, %s49
      %s53 = sphi 0, %s52
      %s69 = sphi 0, %s53
      %s77 = sphi 0, %s79
      %s80 = sphi 0, %s77
      %s81 = sphi 0, %s80
      %s97 = sphi 0, %s81
      %s105 = sphi 0, %s107
      %s108 = sphi 0, %s105
      %s109 = sphi 0, %s108
      %s125 = sphi 0, %s109
      %s129 = sphi 0, %s129
      %s131 = sphi 0, %s129
      %s132 = sphi 0, %s131
      %s146 = sphi 0, %s132
      %s150 = sphi 0, %s150
      %s152 = sphi 0, %s150
      %s153 = sphi 0, %s152
      %s167 = sphi 0, %s153
      %s171 = sphi 0, %s171
      %s173 = sphi 0, %s171
      %s174 = sphi 0, %s173
      %s188 = sphi 0, %s174
      %s192 = sphi 0, %s192
      %s194 = sphi 0, %s192
      %s195 = sphi 0, %s194
      %s209 = sphi 0, %s195
      %s217 = sphi 0, %s219
      %s220 = sphi 0, %s217
      %s221 = sphi 0, %s220
      %s237 = sphi 0, %s221
    $region4: #{tpu_custom_call.1} parent=1 // loop_header_branch
      %28 = sbr.rel (%p26) target = $region8
    $region5: #{tpu_custom_call.1} parent=1 // loop_body
      %s30 = ssub.s32 %s25, 1
      %s31 = ssub.s32 %s25, 2
      %s38 = sadd.s32 1, %s33
      %p39 = scmp.ge.s32.totalorder %s38, 1
      %s40 = scalar_select %p39, 0, %s38
      %s41 = sadd.s32 1, %s32
      %s42 = scalar_select %p39, %s41, %s32
      %p43 = scmp.ge.s32.totalorder %s42, 2
      %s44 = scalar_select %p43, 0, %s42
      %s45 = ssub.s32 %s32, %s44
      %s46 = ssub.s32 %s33, %s40
      %s47 = sor.u32 %s45, %s46
      %p48 = scmp.eq.s32.totalorder %s47, 0
      %s50 = sadd.s32 %s49, 1
      %s51 = scalar_select %p48, %s49, %s50
      %p54 = pneg %p48
      %p55 = scmp.eq.s32.totalorder %s25, 1
      %p56 = por %p54, %p55
      %p57 = scmp.ne.s32.totalorder %s49, %s52
      %p58 = scmp.eq.s32.totalorder %s25, 0
      %p59 = por %p57, %p58
      %p60 = scmp.ne.s32.totalorder %s49, %s52
      %p61 = scmp.eq.s32.totalorder %s30, 1
      %p62 = por %p60, %p61
      %p63 = scmp.ne.s32.totalorder %s52, %s53
      %p64 = scmp.eq.s32.totalorder %s30, 0
      %p65 = por %p63, %p64
      %p66 = scmp.ne.s32.totalorder %s52, %s53
      %p67 = scmp.eq.s32.totalorder %s31, 1
      %p68 = por %p66, %p67
      %p70 = scmp.ne.s32.totalorder %s53, %s69
      %p71 = scmp.eq.s32.totalorder %s31, 0
      %p72 = por %p70, %p71
      %s73 = ssub.s32 %s32, %s44
      %s74 = ssub.s32 %s33, %s40
      %s75 = sor.u32 %s73, %s74
      %p76 = scmp.eq.s32.totalorder %s75, 0
      %s78 = sadd.s32 %s77, 1
      %s79 = scalar_select %p76, %s77, %s78
      %p82 = pneg %p76
      %p83 = scmp.eq.s32.totalorder %s25, 1
      %p84 = por %p82, %p83
      %p85 = scmp.ne.s32.totalorder %s77, %s80
      %p86 = scmp.eq.s32.totalorder %s25, 0
      %p87 = por %p85, %p86
      %p88 = scmp.ne.s32.totalorder %s77, %s80
      %p89 = scmp.eq.s32.totalorder %s30, 1
      %p90 = por %p88, %p89
      %p91 = scmp.ne.s32.totalorder %s80, %s81
      %p92 = scmp.eq.s32.totalorder %s30, 0
      %p93 = por %p91, %p92
      %p94 = scmp.ne.s32.totalorder %s80, %s81
      %p95 = scmp.eq.s32.totalorder %s31, 1
      %p96 = por %p94, %p95
      %p98 = scmp.ne.s32.totalorder %s81, %s97
      %p99 = scmp.eq.s32.totalorder %s31, 0
      %p100 = por %p98, %p99
      %s101 = ssub.s32 %s32, %s44
      %s102 = ssub.s32 %s33, %s40
      %s103 = sor.u32 %s101, %s102
      %p104 = scmp.eq.s32.totalorder %s103, 0
      %s106 = sadd.s32 %s105, 1
      %s107 = scalar_select %p104, %s105, %s106
      %p110 = pneg %p104
      %p111 = scmp.eq.s32.totalorder %s25, 1
      %p112 = por %p110, %p111
      %p113 = scmp.ne.s32.totalorder %s105, %s108
      %p114 = scmp.eq.s32.totalorder %s25, 0
      %p115 = por %p113, %p114
      %p116 = scmp.ne.s32.totalorder %s105, %s108
      %p117 = scmp.eq.s32.totalorder %s30, 1
      %p118 = por %p116, %p117
      %p119 = scmp.ne.s32.totalorder %s108, %s109
      %p120 = scmp.eq.s32.totalorder %s30, 0
      %p121 = por %p119, %p120
      %p122 = scmp.ne.s32.totalorder %s108, %s109
      %p123 = scmp.eq.s32.totalorder %s31, 1
      %p124 = por %p122, %p123
      %p126 = scmp.ne.s32.totalorder %s109, %s125
      %p127 = scmp.eq.s32.totalorder %s31, 0
      %p128 = por %p126, %p127
      %s130 = sadd.s32 %s129, 1
      %p133 = scmp.eq.s32.totalorder %s25, 1
      %p134 = scmp.ne.s32.totalorder %s129, %s131
      %p135 = scmp.eq.s32.totalorder %s25, 0
      %p136 = por %p134, %p135
      %p137 = scmp.ne.s32.totalorder %s129, %s131
      %p138 = scmp.eq.s32.totalorder %s30, 1
      %p139 = por %p137, %p138
      %p140 = scmp.ne.s32.totalorder %s131, %s132
      %p141 = scmp.eq.s32.totalorder %s30, 0
      %p142 = por %p140, %p141
      %p143 = scmp.ne.s32.totalorder %s131, %s132
      %p144 = scmp.eq.s32.totalorder %s31, 1
      %p145 = por %p143, %p144
      %p147 = scmp.ne.s32.totalorder %s132, %s146
      %p148 = scmp.eq.s32.totalorder %s31, 0
      %p149 = por %p147, %p148
      %s151 = sadd.s32 %s150, 1
      %p154 = scmp.eq.s32.totalorder %s25, 1
      %p155 = scmp.ne.s32.totalorder %s150, %s152
      %p156 = scmp.eq.s32.totalorder %s25, 0
      %p157 = por %p155, %p156
      %p158 = scmp.ne.s32.totalorder %s150, %s152
      %p159 = scmp.eq.s32.totalorder %s30, 1
      %p160 = por %p158, %p159
      %p161 = scmp.ne.s32.totalorder %s152, %s153
      %p162 = scmp.eq.s32.totalorder %s30, 0
      %p163 = por %p161, %p162
      %p164 = scmp.ne.s32.totalorder %s152, %s153
      %p165 = scmp.eq.s32.totalorder %s31, 1
      %p166 = por %p164, %p165
      %p168 = scmp.ne.s32.totalorder %s153, %s167
      %p169 = scmp.eq.s32.totalorder %s31, 0
      %p170 = por %p168, %p169
      %s172 = sadd.s32 %s171, 1
      %p175 = scmp.eq.s32.totalorder %s25, 1
      %p176 = scmp.ne.s32.totalorder %s171, %s173
      %p177 = scmp.eq.s32.totalorder %s25, 0
      %p178 = por %p176, %p177
      %p179 = scmp.ne.s32.totalorder %s171, %s173
      %p180 = scmp.eq.s32.totalorder %s30, 1
      %p181 = por %p179, %p180
      %p182 = scmp.ne.s32.totalorder %s173, %s174
      %p183 = scmp.eq.s32.totalorder %s30, 0
      %p184 = por %p182, %p183
      %p185 = scmp.ne.s32.totalorder %s173, %s174
      %p186 = scmp.eq.s32.totalorder %s31, 1
      %p187 = por %p185, %p186
      %p189 = scmp.ne.s32.totalorder %s174, %s188
      %p190 = scmp.eq.s32.totalorder %s31, 0
      %p191 = por %p189, %p190
      %s193 = sadd.s32 %s192, 1
      %p196 = scmp.eq.s32.totalorder %s25, 1
      %p197 = scmp.ne.s32.totalorder %s192, %s194
      %p198 = scmp.eq.s32.totalorder %s25, 0
      %p199 = por %p197, %p198
      %p200 = scmp.ne.s32.totalorder %s192, %s194
      %p201 = scmp.eq.s32.totalorder %s30, 1
      %p202 = por %p200, %p201
      %p203 = scmp.ne.s32.totalorder %s194, %s195
      %p204 = scmp.eq.s32.totalorder %s30, 0
      %p205 = por %p203, %p204
      %p206 = scmp.ne.s32.totalorder %s194, %s195
      %p207 = scmp.eq.s32.totalorder %s31, 1
      %p208 = por %p206, %p207
      %p210 = scmp.ne.s32.totalorder %s195, %s209
      %p211 = scmp.eq.s32.totalorder %s31, 0
      %p212 = por %p210, %p211
      %s213 = ssub.s32 %s32, %s44
      %s214 = ssub.s32 %s33, %s40
      %s215 = sor.u32 %s213, %s214
      %p216 = scmp.eq.s32.totalorder %s215, 0
      %s218 = sadd.s32 %s217, 1
      %s219 = scalar_select %p216, %s217, %s218
      %p222 = pneg %p216
      %p223 = scmp.eq.s32.totalorder %s25, 1
      %p224 = por %p222, %p223
      %p225 = scmp.ne.s32.totalorder %s217, %s220
      %p226 = scmp.eq.s32.totalorder %s25, 0
      %p227 = por %p225, %p226
      %p228 = scmp.ne.s32.totalorder %s217, %s220
      %p229 = scmp.eq.s32.totalorder %s30, 1
      %p230 = por %p228, %p229
      %p231 = scmp.ne.s32.totalorder %s220, %s221
      %p232 = scmp.eq.s32.totalorder %s30, 0
      %p233 = por %p231, %p232
      %p234 = scmp.ne.s32.totalorder %s220, %s221
      %p235 = scmp.eq.s32.totalorder %s31, 1
      %p236 = por %p234, %p235
      %p238 = scmp.ne.s32.totalorder %s221, %s237
      %p239 = scmp.eq.s32.totalorder %s31, 0
      %p240 = por %p238, %p239
      %p241 = scmp.le.s32.totalorder 1, %s25
      %p242 = scmp.lt.s32.totalorder %s25, 3
      %p243 = pnand %p241, %p242
      %p244 = pneg %p243
      // Predicated region
      $region9: #{tpu_custom_call.1} parent=5 // pred_check
        _
      $region10: #{tpu_custom_call.1} parent=5 // pred_check_branch
        %246 = sbr.rel (%p243) target = $region12
      $region11: #{tpu_custom_call.1} parent=5 // pred_region
        %s247 = ssub.s32 %s25, 1
        // Predicated region
        $region13: #{tpu_custom_call.1} parent=11 // pred_check
          %p248 = pneg %p142
        $region14: #{tpu_custom_call.1} parent=11 // pred_check_branch
          %250 = sbr.rel (%p248) target = $region16
        $region15: #{tpu_custom_call.1} parent=11 // pred_region
          %s252 = ssub.s32 64, 64
          %253 = vsyncadd [#allocation5], %s252
          %s255 = sshll.u32 %s3, 4
          %s256 = int_to_ptr.vmem [resolvable:$true] %s255
          %258 = dma.vmem_to_smem %s256, 64, [#allocation8], [#allocation5]
        $region16: #{tpu_custom_call.1} parent=11 // pred_fallthru
          _
        // Predicated region
        $region17: #{tpu_custom_call.1} parent=11 // pred_check
          %p259 = pneg %p163
        $region18: #{tpu_custom_call.1} parent=11 // pred_check_branch
          %261 = sbr.rel (%p259) target = $region20
        $region19: #{tpu_custom_call.1} parent=11 // pred_region
          %s263 = ssub.s32 16, 16
          %264 = vsyncadd [#allocation10], %s263
          %s266 = sshll.u32 %s4, 4
          %s267 = int_to_ptr.vmem [resolvable:$true] %s266
          %269 = dma.vmem_to_smem %s267, 16, [#allocation9], [#allocation10]
        $region20: #{tpu_custom_call.1} parent=11 // pred_fallthru
          _
        // Predicated region
        $region21: #{tpu_custom_call.1} parent=11 // pred_check
          %p270 = pneg %p184
        $region22: #{tpu_custom_call.1} parent=11 // pred_check_branch
          %272 = sbr.rel (%p270) target = $region24
        $region23: #{tpu_custom_call.1} parent=11 // pred_region
          %s274 = ssub.s32 256, 256
          %275 = vsyncadd [#allocation10], %s274
          %s276 = sshll.u32 %s5, 4
          %s277 = int_to_ptr.vmem [resolvable:$true] %s276
          %282 = dma.vmem_to_smem %s277, 256, [#allocation11], [#allocation10], 128, 128, 8
        $region24: #{tpu_custom_call.1} parent=11 // pred_fallthru
          _
        // Predicated region
        $region25: #{tpu_custom_call.1} parent=11 // pred_check
          %p283 = pneg %p205
        $region26: #{tpu_custom_call.1} parent=11 // pred_check_branch
          %285 = sbr.rel (%p283) target = $region28
        $region27: #{tpu_custom_call.1} parent=11 // pred_region
          %s287 = ssub.s32 16, 16
          %288 = vsyncadd [#allocation13], %s287
          %s290 = sshll.u32 %s6, 4
          %s291 = int_to_ptr.vmem [resolvable:$true] %s290
          %293 = dma.vmem_to_smem %s291, 16, [#allocation12], [#allocation13]
        $region28: #{tpu_custom_call.1} parent=11 // pred_fallthru
          _
      $region12: #{tpu_custom_call.1} parent=5 // pred_fallthru
        _
      %p294 = scmp.lt.s32.totalorder %s25, 2
      // Predicated region
      $region29: #{tpu_custom_call.1} parent=5 // pred_check
        %p295 = pneg %p294
      $region30: #{tpu_custom_call.1} parent=5 // pred_check_branch
        %297 = sbr.rel (%p295) target = $region32
      $region31: #{tpu_custom_call.1} parent=5 // pred_region
        // Predicated region
        $region33: #{tpu_custom_call.1} parent=31 // pred_check
          %p298 = pneg %p59
        $region34: #{tpu_custom_call.1} parent=31 // pred_check_branch
          %300 = sbr.rel (%p298) target = $region36
        $region35: #{tpu_custom_call.1} parent=31 // pred_region
          %p301 = scmp.lt.s32.totalorder %s32, 1
          %s302 = scalar_select %p301, %s32, 1
          %p303 = scmp.lt.s32.totalorder %s33, 0
          %s304 = scalar_select %p303, %s33, 0
          %s305 = smul.addr %s302, 4
          %s306 = sadd.s32 %s304, %s305
          %s307 = smul.addr %s306, 2
          %s308 = scalar_lea.vmem %s0, %s307
        $region36: #{tpu_custom_call.1} parent=31 // pred_fallthru
          _
        // Predicated region
        $region37: #{tpu_custom_call.1} parent=31 // pred_check
          %p309 = pneg %p87
        $region38: #{tpu_custom_call.1} parent=31 // pred_check_branch
          %311 = sbr.rel (%p309) target = $region40
        $region39: #{tpu_custom_call.1} parent=31 // pred_region
          %s312 = sand.u32 %s77, 1
          %s313 = scalar_lea.sflag [#allocation3], %s312
          %s314 = sand.u32 %s77, 1
          %s315 = smul.addr %s314, 8
          %s316 = scalar_lea.vmem [#allocation2], %s315
          %s318 = ssub.s32 128, 128
          %319 = vsyncadd %s313, %s318
          %s320 = smul.addr %s32, 4
          %s321 = sadd.s32 %s33, %s320
          %s322 = smul.addr %s321, 32
          %s323 = scalar_lea.hbm %s1, %s322
          %s324 = sshll.u32 %s316, 4
          %s325 = int_to_ptr.vmem [resolvable:$true] %s324
          %330 = dma.hbm_to_vmem [thread:$0]  %s323, 128, %s325, %s313, 32, 32, 2
        $region40: #{tpu_custom_call.1} parent=31 // pred_fallthru
          _
        // Predicated region
        $region41: #{tpu_custom_call.1} parent=31 // pred_check
          %p331 = pneg %p115
        $region42: #{tpu_custom_call.1} parent=31 // pred_check_branch
          %333 = sbr.rel (%p331) target = $region44
        $region43: #{tpu_custom_call.1} parent=31 // pred_region
          %s334 = sand.u32 %s105, 1
          %s335 = scalar_lea.sflag [#allocation7], %s334
          %s336 = sand.u32 %s105, 1
          %s337 = smul.addr %s336, 8
          %s338 = scalar_lea.vmem [#allocation6], %s337
          %s340 = ssub.s32 128, 128
          %341 = vsyncadd %s335, %s340
          %s342 = smul.addr %s32, 4
          %s343 = sadd.s32 %s33, %s342
          %s344 = smul.addr %s343, 32
          %s345 = scalar_lea.hbm %s2, %s344
          %s346 = sshll.u32 %s338, 4
          %s347 = int_to_ptr.vmem [resolvable:$true] %s346
          %352 = dma.hbm_to_vmem [thread:$0]  %s345, 128, %s347, %s335, 32, 32, 2
        $region44: #{tpu_custom_call.1} parent=31 // pred_fallthru
          _
      $region32: #{tpu_custom_call.1} parent=5 // pred_fallthru
        _
      %p353 = scmp.le.s32.totalorder 1, %s25
      %p354 = scmp.lt.s32.totalorder %s25, 3
      %p355 = pnand %p353, %p354
      %p356 = pneg %p355
      // Predicated region
      $region45: #{tpu_custom_call.1} parent=5 // pred_check
        _
      $region46: #{tpu_custom_call.1} parent=5 // pred_check_branch
        %358 = sbr.rel (%p355) target = $region48
      $region47: #{tpu_custom_call.1} parent=5 // pred_region
        %s359 = ssub.s32 %s25, 1
        %s360 = sand.u32 %s80, 1
        %s361 = scalar_lea.sflag [#allocation3], %s360
        %s362 = sand.u32 %s80, 1
        %s363 = smul.addr %s362, 8
        %s364 = scalar_lea.vmem [#allocation2], %s363
        // Predicated region
        $region49: #{tpu_custom_call.1} parent=47 // pred_check
          %p365 = pneg %p93
        $region50: #{tpu_custom_call.1} parent=47 // pred_check_branch
          %367 = sbr.rel (%p365) target = $region52
        $region51: #{tpu_custom_call.1} parent=47 // pred_region
          %368 = dma.done %s361, 128
        $region52: #{tpu_custom_call.1} parent=47 // pred_fallthru
          _
        %s369 = sand.u32 %s108, 1
        %s370 = scalar_lea.sflag [#allocation7], %s369
        %s371 = sand.u32 %s108, 1
        %s372 = smul.addr %s371, 8
        %s373 = scalar_lea.vmem [#allocation6], %s372
        // Predicated region
        $region53: #{tpu_custom_call.1} parent=47 // pred_check
          %p374 = pneg %p121
        $region54: #{tpu_custom_call.1} parent=47 // pred_check_branch
          %376 = sbr.rel (%p374) target = $region56
        $region55: #{tpu_custom_call.1} parent=47 // pred_region
          %377 = dma.done %s370, 128
        $region56: #{tpu_custom_call.1} parent=47 // pred_fallthru
          _
        // Predicated region
        $region57: #{tpu_custom_call.1} parent=47 // pred_check
          %p378 = pneg %p142
        $region58: #{tpu_custom_call.1} parent=47 // pred_check_branch
          %380 = sbr.rel (%p378) target = $region60
        $region59: #{tpu_custom_call.1} parent=47 // pred_region
          %381 = dma.done [#allocation5], 64
        $region60: #{tpu_custom_call.1} parent=47 // pred_fallthru
          _
        // Predicated region
        $region61: #{tpu_custom_call.1} parent=47 // pred_check
          %p382 = pneg %p163
        $region62: #{tpu_custom_call.1} parent=47 // pred_check_branch
          %384 = sbr.rel (%p382) target = $region64
        $region63: #{tpu_custom_call.1} parent=47 // pred_region
          %385 = dma.done [#allocation10], 16
        $region64: #{tpu_custom_call.1} parent=47 // pred_fallthru
          _
        // Predicated region
        $region65: #{tpu_custom_call.1} parent=47 // pred_check
          %p386 = pneg %p184
        $region66: #{tpu_custom_call.1} parent=47 // pred_check_branch
          %388 = sbr.rel (%p386) target = $region68
        $region67: #{tpu_custom_call.1} parent=47 // pred_region
          %389 = dma.done [#allocation10], 256
        $region68: #{tpu_custom_call.1} parent=47 // pred_fallthru
          _
        // Predicated region
        $region69: #{tpu_custom_call.1} parent=47 // pred_check
          %p390 = pneg %p205
        $region70: #{tpu_custom_call.1} parent=47 // pred_check_branch
          %392 = sbr.rel (%p390) target = $region72
        $region71: #{tpu_custom_call.1} parent=47 // pred_region
          %393 = dma.done [#allocation13], 16
        $region72: #{tpu_custom_call.1} parent=47 // pred_fallthru
          _
        %394 = sfence
        %p395 = scmp.lt.s32.totalorder %s34, 1
        %s396 = scalar_select %p395, %s34, 1
        %p397 = scmp.lt.s32.totalorder %s35, 0
        %s398 = scalar_select %p397, %s35, 0
        %s399 = smul.addr %s396, 4
        %s400 = sadd.s32 %s398, %s399
        %s401 = smul.addr %s400, 2
        %s402 = scalar_lea.vmem %s0, %s401
        %p403 = pneg %p65
        %p404 = pneg %p62
        %s405 = sand.u32 %s80, 1
        %s406 = scalar_lea.sflag [#allocation3], %s405
        %s407 = sand.u32 %s80, 1
        %s408 = smul.addr %s407, 8
        %s409 = scalar_lea.vmem [#allocation2], %s408
        %p410 = pneg %p93
        %p411 = pneg %p90
        %s412 = sand.u32 %s108, 1
        %s413 = scalar_lea.sflag [#allocation7], %s412
        %s414 = sand.u32 %s108, 1
        %s415 = smul.addr %s414, 8
        %s416 = scalar_lea.vmem [#allocation6], %s415
        %p417 = pneg %p121
        %p418 = pneg %p118
        %p419 = pneg %p142
        %p420 = pneg %p139
        %p421 = pneg %p163
        %p422 = pneg %p160
        %p423 = pneg %p184
        %p424 = pneg %p181
        %p425 = pneg %p205
        %p426 = pneg %p202
        %p427 = pneg %p233
        %p428 = pneg %p230
        %s429 = sand.u32 %s220, 1
        %s430 = scalar_lea.sflag [#allocation4], %s429
        %s431 = sand.u32 %s220, 1
        %s432 = smul.addr %s431, 8
        %s433 = scalar_lea.vmem [#allocation14], %s432
        %p434 = scmp.lt.s32.totalorder %s34, 1
        %s435 = scalar_select %p434, %s34, 1
        %p436 = scmp.lt.s32.totalorder %s35, 0
        %s437 = scalar_select %p436, %s35, 0
        %s438 = smul.addr %s435, 4
        %s439 = sadd.s32 %s437, %s438
        %s440 = smul.addr %s439, 2
        %s441 = scalar_lea.vmem %s0, %s440
        %s442 = sld [smem:[#allocation8]]
        %s443 = sld [smem:[#allocation8 + $0x1]]
        %s444 = sld [smem:[#allocation8 + $0x2]]
        %s445 = sld [smem:[#allocation8 + $0x3]]
        %s446 = sld [smem:[#allocation8 + $0x4]]
        %s447 = sld [smem:[#allocation8 + $0x5]]
        %s448 = sld [smem:[#allocation8 + $0x6]]
        %s449 = sld [smem:[#allocation8 + $0x7]]
        %s450 = sld [smem:[#allocation8 + $0x8]]
        %s451 = sld [smem:[#allocation8 + $0x9]]
        %s452 = sld [smem:[#allocation8 + $0xa]]
        %s453 = sld [smem:[#allocation8 + $0xb]]
        %s454 = sld [smem:[#allocation8 + $0x80]]
        %s455 = sld [smem:[#allocation8 + $0x81]]
        %s456 = sld [smem:[#allocation8 + $0x82]]
        %s457 = sld [smem:[#allocation8 + $0x83]]
        %s458 = sld [smem:[#allocation8 + $0x84]]
        %s459 = sld [smem:[#allocation8 + $0x85]]
        %s460 = sld [smem:[#allocation8 + $0x86]]
        %s461 = sld [smem:[#allocation8 + $0x87]]
        %s462 = sld [smem:[#allocation8 + $0x88]]
        %s463 = sld [smem:[#allocation8 + $0x89]]
        %s464 = sld [smem:[#allocation8 + $0x8a]]
        %s465 = sld [smem:[#allocation8 + $0x8b]]
        %s466 = sld [smem:[#allocation8 + $0x100]]
        %s467 = sld [smem:[#allocation8 + $0x101]]
        %s468 = sld [smem:[#allocation8 + $0x102]]
        %s469 = sld [smem:[#allocation8 + $0x103]]
        %s470 = sld [smem:[#allocation8 + $0x104]]
        %s471 = sld [smem:[#allocation8 + $0x105]]
        %s472 = sld [smem:[#allocation8 + $0x106]]
        %s473 = sld [smem:[#allocation8 + $0x107]]
        %s474 = sld [smem:[#allocation8 + $0x108]]
        %s475 = sld [smem:[#allocation8 + $0x109]]
        %s476 = sld [smem:[#allocation8 + $0x10a]]
        %s477 = sld [smem:[#allocation8 + $0x10b]]
        %s478 = sld [smem:[#allocation8 + $0x180]]
        %s479 = sld [smem:[#allocation8 + $0x181]]
        %s480 = sld [smem:[#allocation8 + $0x182]]
        %s481 = sld [smem:[#allocation8 + $0x183]]
        %s482 = sld [smem:[#allocation8 + $0x184]]
        %s483 = sld [smem:[#allocation8 + $0x185]]
        %s484 = sld [smem:[#allocation8 + $0x186]]
        %s485 = sld [smem:[#allocation8 + $0x187]]
        %s486 = sld [smem:[#allocation8 + $0x188]]
        %s487 = sld [smem:[#allocation8 + $0x189]]
        %s488 = sld [smem:[#allocation8 + $0x18a]]
        %s489 = sld [smem:[#allocation8 + $0x18b]]
        %s490 = sld [smem:[#allocation9]]
        %s491 = sld [smem:[#allocation9 + $0x1]]
        %s492 = sld [smem:[#allocation9 + $0x2]]
        %s493 = sld [smem:[#allocation9 + $0x3]]
        %s494 = sld [smem:[#allocation11]]
        %s495 = sld [smem:[#allocation11 + $0x1]]
        %s496 = sld [smem:[#allocation11 + $0x2]]
        %s497 = sld [smem:[#allocation11 + $0x3]]
        %s498 = sld [smem:[#allocation11 + $0x80]]
        %s499 = sld [smem:[#allocation11 + $0x81]]
        %s500 = sld [smem:[#allocation11 + $0x82]]
        %s501 = sld [smem:[#allocation11 + $0x83]]
        %s502 = sld [smem:[#allocation11 + $0x100]]
        %s503 = sld [smem:[#allocation11 + $0x101]]
        %s504 = sld [smem:[#allocation11 + $0x102]]
        %s505 = sld [smem:[#allocation11 + $0x103]]
        %s506 = sld [smem:[#allocation11 + $0x180]]
        %s507 = sld [smem:[#allocation11 + $0x181]]
        %s508 = sld [smem:[#allocation11 + $0x182]]
        %s509 = sld [smem:[#allocation11 + $0x183]]
        %s510 = sld [smem:[#allocation11 + $0x200]]
        %s511 = sld [smem:[#allocation11 + $0x201]]
        %s512 = sld [smem:[#allocation11 + $0x202]]
        %s513 = sld [smem:[#allocation11 + $0x203]]
        %s514 = sld [smem:[#allocation11 + $0x280]]
        %s515 = sld [smem:[#allocation11 + $0x281]]
        %s516 = sld [smem:[#allocation11 + $0x282]]
        %s517 = sld [smem:[#allocation11 + $0x283]]
        %s518 = sld [smem:[#allocation11 + $0x300]]
        %s519 = sld [smem:[#allocation11 + $0x301]]
        %s520 = sld [smem:[#allocation11 + $0x302]]
        %s521 = sld [smem:[#allocation11 + $0x303]]
        %s522 = sld [smem:[#allocation11 + $0x380]]
        %s523 = sld [smem:[#allocation11 + $0x381]]
        %s524 = sld [smem:[#allocation11 + $0x382]]
        %s525 = sld [smem:[#allocation11 + $0x383]]
        %s526 = sld [smem:[#allocation11 + $0x400]]
        %s527 = sld [smem:[#allocation11 + $0x401]]
        %s528 = sld [smem:[#allocation11 + $0x402]]
        %s529 = sld [smem:[#allocation11 + $0x403]]
        %s530 = sld [smem:[#allocation11 + $0x480]]
        %s531 = sld [smem:[#allocation11 + $0x481]]
        %s532 = sld [smem:[#allocation11 + $0x482]]
        %s533 = sld [smem:[#allocation11 + $0x483]]
        %s534 = sld [smem:[#allocation11 + $0x500]]
        %s535 = sld [smem:[#allocation11 + $0x501]]
        %s536 = sld [smem:[#allocation11 + $0x502]]
        %s537 = sld [smem:[#allocation11 + $0x503]]
        %s538 = sld [smem:[#allocation11 + $0x580]]
        %s539 = sld [smem:[#allocation11 + $0x581]]
        %s540 = sld [smem:[#allocation11 + $0x582]]
        %s541 = sld [smem:[#allocation11 + $0x583]]
        %s542 = sld [smem:[#allocation12]]
        %s543 = sld [smem:[#allocation12 + $0x1]]
        %s544 = sld [smem:[#allocation12 + $0x2]]
        %s545 = sld [smem:[#allocation12 + $0x3]]
        %s546 = sld [smem:[#allocation12 + $0x4]]
        %s547 = sld [smem:[#allocation12 + $0x5]]
        %s548 = sld [smem:[#allocation12 + $0x6]]
        %s549 = sld [smem:[#allocation12 + $0x7]]
        %s550 = sld [smem:[#allocation12 + $0x8]]
        %s551 = sld [smem:[#allocation12 + $0x9]]
        %s552 = sld [smem:[#allocation12 + $0xa]]
        %s553 = sld [smem:[#allocation12 + $0xb]]
        %v554 = vld [vmem:[%s441] sm:$0x3]
        %s555 = sadd.s32 0, 2
        %s556 = scalar_lea.vmem %s441, %s555
        %v557 = vld [vmem:[%s556] sm:$0x3]
        %s558 = sadd.s32 0, 4
        %s559 = scalar_lea.vmem %s441, %s558
        %v560 = vld [vmem:[%s559] sm:$0x3]
        %s561 = sadd.s32 0, 6
        %s562 = scalar_lea.vmem %s441, %s561
        %v563 = vld [vmem:[%s562] sm:$0x3]
        %v564 = vld [vmem:[%s364] sm:$0x3]
        %s565 = scalar_lea.vmem %s364, %s555 [#allocation2]
        %v566 = vld [vmem:[%s565] sm:$0x3]
        %s567 = scalar_lea.vmem %s364, %s558 [#allocation2]
        %v568 = vld [vmem:[%s567] sm:$0x3]
        %s569 = scalar_lea.vmem %s364, %s561 [#allocation2]
        %v570 = vld [vmem:[%s569] sm:$0x3]
        %v571 = vld [vmem:[%s373] sm:$0x3]
        %s572 = scalar_lea.vmem %s373, %s555 [#allocation6]
        %v573 = vld [vmem:[%s572] sm:$0x3]
        %s574 = scalar_lea.vmem %s373, %s558 [#allocation6]
        %v575 = vld [vmem:[%s574] sm:$0x3]
        %s576 = scalar_lea.vmem %s373, %s561 [#allocation6]
        %v577 = vld [vmem:[%s576] sm:$0x3]
        %v578 = vstv %s442
        %v579 = vmul.f32 %v578, %v554
        %v580 = vstv %s443
        %v581 = vmul.f32 %v580, %v557
        %v582 = vadd.f32 %v579, %v581
        %v583 = vstv %s444
        %v584 = vmul.f32 %v583, %v560
        %v585 = vadd.f32 %v582, %v584
        %v586 = vstv %s445
        %v587 = vmul.f32 %v586, %v563
        %v588 = vadd.f32 %v585, %v587
        %v589 = vstv %s446
        %v590 = vmul.f32 %v589, %v564
        %v591 = vadd.f32 %v588, %v590
        %v592 = vstv %s447
        %v593 = vmul.f32 %v592, %v566
        %v594 = vadd.f32 %v591, %v593
        %v595 = vstv %s448
        %v596 = vmul.f32 %v595, %v568
        %v597 = vadd.f32 %v594, %v596
        %v598 = vstv %s449
        %v599 = vmul.f32 %v598, %v570
        %v600 = vadd.f32 %v597, %v599
        %v601 = vstv %s450
        %v602 = vmul.f32 %v601, %v571
        %v603 = vadd.f32 %v600, %v602
        %v604 = vstv %s451
        %v605 = vmul.f32 %v604, %v573
        %v606 = vadd.f32 %v603, %v605
        %v607 = vstv %s452
        %v608 = vmul.f32 %v607, %v575
        %v609 = vadd.f32 %v606, %v608
        %v610 = vstv %s453
        %v611 = vmul.f32 %v610, %v577
        %v612 = vadd.f32 %v609, %v611
        %v613 = vstv %s490
        %v614 = vadd.f32 %v612, %v613
        %v615 = vstv %s454
        %v616 = vmul.f32 %v615, %v554
        %v617 = vstv %s455
        %v618 = vmul.f32 %v617, %v557
        %v619 = vadd.f32 %v616, %v618
        %v620 = vstv %s456
        %v621 = vmul.f32 %v620, %v560
        %v622 = vadd.f32 %v619, %v621
        %v623 = vstv %s457
        %v624 = vmul.f32 %v623, %v563
        %v625 = vadd.f32 %v622, %v624
        %v626 = vstv %s458
        %v627 = vmul.f32 %v626, %v564
        %v628 = vadd.f32 %v625, %v627
        %v629 = vstv %s459
        %v630 = vmul.f32 %v629, %v566
        %v631 = vadd.f32 %v628, %v630
        %v632 = vstv %s460
        %v633 = vmul.f32 %v632, %v568
        %v634 = vadd.f32 %v631, %v633
        %v635 = vstv %s461
        %v636 = vmul.f32 %v635, %v570
        %v637 = vadd.f32 %v634, %v636
        %v638 = vstv %s462
        %v639 = vmul.f32 %v638, %v571
        %v640 = vadd.f32 %v637, %v639
        %v641 = vstv %s463
        %v642 = vmul.f32 %v641, %v573
        %v643 = vadd.f32 %v640, %v642
        %v644 = vstv %s464
        %v645 = vmul.f32 %v644, %v575
        %v646 = vadd.f32 %v643, %v645
        %v647 = vstv %s465
        %v648 = vmul.f32 %v647, %v577
        %v649 = vadd.f32 %v646, %v648
        %v650 = vstv %s491
        %v651 = vadd.f32 %v649, %v650
        %v652 = vstv %s466
        %v653 = vmul.f32 %v652, %v554
        %v654 = vstv %s467
        %v655 = vmul.f32 %v654, %v557
        %v656 = vadd.f32 %v653, %v655
        %v657 = vstv %s468
        %v658 = vmul.f32 %v657, %v560
        %v659 = vadd.f32 %v656, %v658
        %v660 = vstv %s469
        %v661 = vmul.f32 %v660, %v563
        %v662 = vadd.f32 %v659, %v661
        %v663 = vstv %s470
        %v664 = vmul.f32 %v663, %v564
        %v665 = vadd.f32 %v662, %v664
        %v666 = vstv %s471
        %v667 = vmul.f32 %v666, %v566
        %v668 = vadd.f32 %v665, %v667
        %v669 = vstv %s472
        %v670 = vmul.f32 %v669, %v568
        %v671 = vadd.f32 %v668, %v670
        %v672 = vstv %s473
        %v673 = vmul.f32 %v672, %v570
        %v674 = vadd.f32 %v671, %v673
        %v675 = vstv %s474
        %v676 = vmul.f32 %v675, %v571
        %v677 = vadd.f32 %v674, %v676
        %v678 = vstv %s475
        %v679 = vmul.f32 %v678, %v573
        %v680 = vadd.f32 %v677, %v679
        %v681 = vstv %s476
        %v682 = vmul.f32 %v681, %v575
        %v683 = vadd.f32 %v680, %v682
        %v684 = vstv %s477
        %v685 = vmul.f32 %v684, %v577
        %v686 = vadd.f32 %v683, %v685
        %v687 = vstv %s492
        %v688 = vadd.f32 %v686, %v687
        %v689 = vstv %s478
        %v690 = vmul.f32 %v689, %v554
        %v691 = vstv %s479
        %v692 = vmul.f32 %v691, %v557
        %v693 = vadd.f32 %v690, %v692
        %v694 = vstv %s480
        %v695 = vmul.f32 %v694, %v560
        %v696 = vadd.f32 %v693, %v695
        %v697 = vstv %s481
        %v698 = vmul.f32 %v697, %v563
        %v699 = vadd.f32 %v696, %v698
        %v700 = vstv %s482
        %v701 = vmul.f32 %v700, %v564
        %v702 = vadd.f32 %v699, %v701
        %v703 = vstv %s483
        %v704 = vmul.f32 %v703, %v566
        %v705 = vadd.f32 %v702, %v704
        %v706 = vstv %s484
        %v707 = vmul.f32 %v706, %v568
        %v708 = vadd.f32 %v705, %v707
        %v709 = vstv %s485
        %v710 = vmul.f32 %v709, %v570
        %v711 = vadd.f32 %v708, %v710
        %v712 = vstv %s486
        %v713 = vmul.f32 %v712, %v571
        %v714 = vadd.f32 %v711, %v713
        %v715 = vstv %s487
        %v716 = vmul.f32 %v715, %v573
        %v717 = vadd.f32 %v714, %v716
        %v718 = vstv %s488
        %v719 = vmul.f32 %v718, %v575
        %v720 = vadd.f32 %v717, %v719
        %v721 = vstv %s489
        %v722 = vmul.f32 %v721, %v577
        %v723 = vadd.f32 %v720, %v722
        %v724 = vstv %s493
        %v725 = vadd.f32 %v723, %v724
        %v726 = vstv %s494
        %v727 = vmul.f32 %v726, %v614
        %v728 = vstv %s495
        %v729 = vmul.f32 %v728, %v651
        %v730 = vadd.f32 %v727, %v729
        %v731 = vstv %s496
        %v732 = vmul.f32 %v731, %v688
        %v733 = vadd.f32 %v730, %v732
        %v734 = vstv %s497
        %v735 = vmul.f32 %v734, %v725
        %v736 = vadd.f32 %v733, %v735
        %v737 = vstv %s542
        %v738 = vadd.f32 %v736, %v737
        %v739 = vxor.u32 %v738, 2147483648
        %v740 = vmul.f32 %v739, 1.442695
        %v741 = vpow.pop %v740
        %v742 = vadd.f32 %v741, 1.0
        %v743 = vrcp.pop %v742
        %v744 = vmul.f32 1.0, %v743
        %v745 = vstv %s498
        %v746 = vmul.f32 %v745, %v614
        %v747 = vstv %s499
        %v748 = vmul.f32 %v747, %v651
        %v749 = vadd.f32 %v746, %v748
        %v750 = vstv %s500
        %v751 = vmul.f32 %v750, %v688
        %v752 = vadd.f32 %v749, %v751
        %v753 = vstv %s501
        %v754 = vmul.f32 %v753, %v725
        %v755 = vadd.f32 %v752, %v754
        %v756 = vstv %s543
        %v757 = vadd.f32 %v755, %v756
        %v758 = vxor.u32 %v757, 2147483648
        %v759 = vmul.f32 %v758, 1.442695
        %v760 = vpow.pop %v759
        %v761 = vadd.f32 %v760, 1.0
        %v762 = vrcp.pop %v761
        %v763 = vmul.f32 1.0, %v762
        %v764 = vstv %s502
        %v765 = vmul.f32 %v764, %v614
        %v766 = vstv %s503
        %v767 = vmul.f32 %v766, %v651
        %v768 = vadd.f32 %v765, %v767
        %v769 = vstv %s504
        %v770 = vmul.f32 %v769, %v688
        %v771 = vadd.f32 %v768, %v770
        %v772 = vstv %s505
        %v773 = vmul.f32 %v772, %v725
        %v774 = vadd.f32 %v771, %v773
        %v775 = vstv %s544
        %v776 = vadd.f32 %v774, %v775
        %v777 = vxor.u32 %v776, 2147483648
        %v778 = vmul.f32 %v777, 1.442695
        %v779 = vpow.pop %v778
        %v780 = vadd.f32 %v779, 1.0
        %v781 = vrcp.pop %v780
        %v782 = vmul.f32 1.0, %v781
        %v783 = vstv %s506
        %v784 = vmul.f32 %v783, %v614
        %v785 = vstv %s507
        %v786 = vmul.f32 %v785, %v651
        %v787 = vadd.f32 %v784, %v786
        %v788 = vstv %s508
        %v789 = vmul.f32 %v788, %v688
        %v790 = vadd.f32 %v787, %v789
        %v791 = vstv %s509
        %v792 = vmul.f32 %v791, %v725
        %v793 = vadd.f32 %v790, %v792
        %v794 = vstv %s545
        %v795 = vadd.f32 %v793, %v794
        %v796 = vxor.u32 %v795, 2147483648
        %v797 = vmul.f32 %v796, 1.442695
        %v798 = vpow.pop %v797
        %v799 = vadd.f32 %v798, 1.0
        %v800 = vrcp.pop %v799
        %v801 = vmul.f32 1.0, %v800
        %v802 = vstv %s510
        %v803 = vmul.f32 %v802, %v614
        %v804 = vstv %s511
        %v805 = vmul.f32 %v804, %v651
        %v806 = vadd.f32 %v803, %v805
        %v807 = vstv %s512
        %v808 = vmul.f32 %v807, %v688
        %v809 = vadd.f32 %v806, %v808
        %v810 = vstv %s513
        %v811 = vmul.f32 %v810, %v725
        %v812 = vadd.f32 %v809, %v811
        %v813 = vstv %s546
        %v814 = vadd.f32 %v812, %v813
        %v815 = vxor.u32 %v814, 2147483648
        %v816 = vmul.f32 %v815, 1.442695
        %v817 = vpow.pop %v816
        %v818 = vadd.f32 %v817, 1.0
        %v819 = vrcp.pop %v818
        %v820 = vmul.f32 1.0, %v819
        %v821 = vstv %s514
        %v822 = vmul.f32 %v821, %v614
        %v823 = vstv %s515
        %v824 = vmul.f32 %v823, %v651
        %v825 = vadd.f32 %v822, %v824
        %v826 = vstv %s516
        %v827 = vmul.f32 %v826, %v688
        %v828 = vadd.f32 %v825, %v827
        %v829 = vstv %s517
        %v830 = vmul.f32 %v829, %v725
        %v831 = vadd.f32 %v828, %v830
        %v832 = vstv %s547
        %v833 = vadd.f32 %v831, %v832
        %v834 = vxor.u32 %v833, 2147483648
        %v835 = vmul.f32 %v834, 1.442695
        %v836 = vpow.pop %v835
        %v837 = vadd.f32 %v836, 1.0
        %v838 = vrcp.pop %v837
        %v839 = vmul.f32 1.0, %v838
        %v840 = vstv %s518
        %v841 = vmul.f32 %v840, %v614
        %v842 = vstv %s519
        %v843 = vmul.f32 %v842, %v651
        %v844 = vadd.f32 %v841, %v843
        %v845 = vstv %s520
        %v846 = vmul.f32 %v845, %v688
        %v847 = vadd.f32 %v844, %v846
        %v848 = vstv %s521
        %v849 = vmul.f32 %v848, %v725
        %v850 = vadd.f32 %v847, %v849
        %v851 = vstv %s548
        %v852 = vadd.f32 %v850, %v851
        %v853 = vxor.u32 %v852, 2147483648
        %v854 = vmul.f32 %v853, 1.442695
        %v855 = vpow.pop %v854
        %v856 = vadd.f32 %v855, 1.0
        %v857 = vrcp.pop %v856
        %v858 = vmul.f32 1.0, %v857
        %v859 = vstv %s522
        %v860 = vmul.f32 %v859, %v614
        %v861 = vstv %s523
        %v862 = vmul.f32 %v861, %v651
        %v863 = vadd.f32 %v860, %v862
        %v864 = vstv %s524
        %v865 = vmul.f32 %v864, %v688
        %v866 = vadd.f32 %v863, %v865
        %v867 = vstv %s525
        %v868 = vmul.f32 %v867, %v725
        %v869 = vadd.f32 %v866, %v868
        %v870 = vstv %s549
        %v871 = vadd.f32 %v869, %v870
        %v872 = vxor.u32 %v871, 2147483648
        %v873 = vmul.f32 %v872, 1.442695
        %v874 = vpow.pop %v873
        %v875 = vadd.f32 %v874, 1.0
        %v876 = vrcp.pop %v875
        %v877 = vmul.f32 1.0, %v876
        %v878 = vstv %s526
        %v879 = vmul.f32 %v878, %v614
        %v880 = vstv %s527
        %v881 = vmul.f32 %v880, %v651
        %v882 = vadd.f32 %v879, %v881
        %v883 = vstv %s528
        %v884 = vmul.f32 %v883, %v688
        %v885 = vadd.f32 %v882, %v884
        %v886 = vstv %s529
        %v887 = vmul.f32 %v886, %v725
        %v888 = vadd.f32 %v885, %v887
        %v889 = vstv %s550
        %v890 = vadd.f32 %v888, %v889
        %v891 = vxor.u32 %v890, 2147483648
        %v892 = vmul.f32 %v891, 1.442695
        %v893 = vpow.pop %v892
        %v894 = vadd.f32 %v893, 1.0
        %v895 = vrcp.pop %v894
        %v896 = vmul.f32 1.0, %v895
        %v897 = vstv %s530
        %v898 = vmul.f32 %v897, %v614
        %v899 = vstv %s531
        %v900 = vmul.f32 %v899, %v651
        %v901 = vadd.f32 %v898, %v900
        %v902 = vstv %s532
        %v903 = vmul.f32 %v902, %v688
        %v904 = vadd.f32 %v901, %v903
        %v905 = vstv %s533
        %v906 = vmul.f32 %v905, %v725
        %v907 = vadd.f32 %v904, %v906
        %v908 = vstv %s551
        %v909 = vadd.f32 %v907, %v908
        %v910 = vxor.u32 %v909, 2147483648
        %v911 = vmul.f32 %v910, 1.442695
        %v912 = vpow.pop %v911
        %v913 = vadd.f32 %v912, 1.0
        %v914 = vrcp.pop %v913
        %v915 = vmul.f32 1.0, %v914
        %v916 = vstv %s534
        %v917 = vmul.f32 %v916, %v614
        %v918 = vstv %s535
        %v919 = vmul.f32 %v918, %v651
        %v920 = vadd.f32 %v917, %v919
        %v921 = vstv %s536
        %v922 = vmul.f32 %v921, %v688
        %v923 = vadd.f32 %v920, %v922
        %v924 = vstv %s537
        %v925 = vmul.f32 %v924, %v725
        %v926 = vadd.f32 %v923, %v925
        %v927 = vstv %s552
        %v928 = vadd.f32 %v926, %v927
        %v929 = vxor.u32 %v928, 2147483648
        %v930 = vmul.f32 %v929, 1.442695
        %v931 = vpow.pop %v930
        %v932 = vadd.f32 %v931, 1.0
        %v933 = vrcp.pop %v932
        %v934 = vmul.f32 1.0, %v933
        %v935 = vstv %s538
        %v936 = vmul.f32 %v935, %v614
        %v937 = vstv %s539
        %v938 = vmul.f32 %v937, %v651
        %v939 = vadd.f32 %v936, %v938
        %v940 = vstv %s540
        %v941 = vmul.f32 %v940, %v688
        %v942 = vadd.f32 %v939, %v941
        %v943 = vstv %s541
        %v944 = vmul.f32 %v943, %v725
        %v945 = vadd.f32 %v942, %v944
        %v946 = vstv %s553
        %v947 = vadd.f32 %v945, %v946
        %v948 = vxor.u32 %v947, 2147483648
        %v949 = vmul.f32 %v948, 1.442695
        %v950 = vpow.pop %v949
        %v951 = vadd.f32 %v950, 1.0
        %v952 = vrcp.pop %v951
        %v953 = vmul.f32 1.0, %v952
        %v954 = vmul.f32 %v744, %v554
        %v955 = vmul.f32 %v820, %v564
        %v956 = vadd.f32 %v954, %v955
        %v957 = vmul.f32 %v896, %v571
        %v958 = vadd.f32 %v956, %v957
        %959 = vst [vmem:[%s433] sm:$0x3] %v958
        %v960 = vmul.f32 %v763, %v557
        %v961 = vmul.f32 %v839, %v566
        %v962 = vadd.f32 %v960, %v961
        %v963 = vmul.f32 %v915, %v573
        %v964 = vadd.f32 %v962, %v963
        %s965 = scalar_lea.vmem %s433, %s555 [#allocation14]
        %966 = vst [vmem:[%s965] sm:$0x3] %v964
        %v967 = vmul.f32 %v782, %v560
        %v968 = vmul.f32 %v858, %v568
        %v969 = vadd.f32 %v967, %v968
        %v970 = vmul.f32 %v934, %v575
        %v971 = vadd.f32 %v969, %v970
        %s972 = scalar_lea.vmem %s433, %s558 [#allocation14]
        %973 = vst [vmem:[%s972] sm:$0x3] %v971
        %v974 = vmul.f32 %v801, %v563
        %v975 = vmul.f32 %v877, %v570
        %v976 = vadd.f32 %v974, %v975
        %v977 = vmul.f32 %v953, %v577
        %v978 = vadd.f32 %v976, %v977
        %s979 = scalar_lea.vmem %s433, %s561 [#allocation14]
        %980 = vst [vmem:[%s979] sm:$0x3] %v978
        %s981 = sand.u32 %s220, 1
        %s982 = scalar_lea.sflag [#allocation4], %s981
        %s983 = sand.u32 %s220, 1
        %s984 = smul.addr %s983, 8
        %s985 = scalar_lea.vmem [#allocation14], %s984
        // Predicated region
        $region73: #{tpu_custom_call.1} parent=47 // pred_check
          %p986 = pneg %p230
        $region74: #{tpu_custom_call.1} parent=47 // pred_check_branch
          %988 = sbr.rel (%p986) target = $region76
        $region75: #{tpu_custom_call.1} parent=47 // pred_region
          %s990 = ssub.s32 128, 128
          %991 = vsyncadd %s982, %s990
          %s992 = smul.addr %s34, 4
          %s993 = sadd.s32 %s35, %s992
          %s994 = smul.addr %s993, 32
          %s995 = scalar_lea.hbm %s7, %s994
          %s996 = sshll.u32 %s985, 4
          %s997 = int_to_ptr.vmem [resolvable:$true] %s996
          %1002 = dma.vmem_to_hbm [thread:$0]  %s997, 128, %s995, %s982, 32, 32, 2
        $region76: #{tpu_custom_call.1} parent=47 // pred_fallthru
          _
      $region48: #{tpu_custom_call.1} parent=5 // pred_fallthru
        _
      %p1003 = scmp.le.s32.totalorder 2, %s25
      // Predicated region
      $region77: #{tpu_custom_call.1} parent=5 // pred_check
        %p1004 = pneg %p1003
      $region78: #{tpu_custom_call.1} parent=5 // pred_check_branch
        %1006 = sbr.rel (%p1004) target = $region80
      $region79: #{tpu_custom_call.1} parent=5 // pred_region
        %s1007 = ssub.s32 %s25, 2
        // Predicated region
        $region81: #{tpu_custom_call.1} parent=79 // pred_check
          %p1008 = pneg %p236
        $region82: #{tpu_custom_call.1} parent=79 // pred_check_branch
          %1010 = sbr.rel (%p1008) target = $region84
        $region83: #{tpu_custom_call.1} parent=79 // pred_region
          %s1011 = sand.u32 %s221, 1
          %s1012 = scalar_lea.sflag [#allocation4], %s1011
          %s1013 = sand.u32 %s221, 1
          %s1014 = smul.addr %s1013, 8
          %s1015 = scalar_lea.vmem [#allocation14], %s1014
          %1016 = dma.done %s1012, 128
        $region84: #{tpu_custom_call.1} parent=79 // pred_fallthru
          _
      $region80: #{tpu_custom_call.1} parent=5 // pred_fallthru
        _
    $region6: #{tpu_custom_call.1} parent=1 // loop_footer
      %s29 = sadd.s32 1, %s25
    $region7: #{tpu_custom_call.1} parent=1 // loop_footer_branch
      %24 = sbr.rel target = $region3
    $region8: #{tpu_custom_call.1} parent=1 // loop_exit
      _
    %1017 = vsyncpa [#allocation3], 1
    %s1018 = scalar_lea.sflag [#allocation3], 1
    %1019 = vsyncpa %s1018, 1
    %1020 = vsyncpa [#allocation7], 1
    %s1021 = scalar_lea.sflag [#allocation7], 1
    %1022 = vsyncpa %s1021, 1
    %1023 = vsyncpa [#allocation4], 1
    %s1024 = scalar_lea.sflag [#allocation4], 1
    %1025 = vsyncpa %s1024, 1
    %1026 = vsyncpa [#allocation5], 1
    %s1027 = scalar_lea.sflag [#allocation5], 1
    %1028 = vsyncpa %s1027, 1
    %1029 = vsyncpa [#allocation10], 1
    %1030 = vsyncpa [#allocation13], 1

</llo_original>
